<compile_context>
chip_gen: v7x
topology: tpu7x:2x2x1
jax: 0.10.0
libtpu: 0.0.40
codegen_flags: <defaults>
</compile_context>

<pallas_src>
import functools
import jax
import jax.numpy as jnp
from jax.experimental import pallas as pl
from jax.experimental.pallas import tpu as pltpu


def _dense_layer_kernel(x_ref, s1_ref, b1_ref, w1s_ref, b2_ref, w2_ref,
                        wmask_ref, o_ref, mid_ref, *, H, W):
    """Fused BN1->ReLU->1x1conv->(+b2)->ReLU->3x3conv for one image.

    x_ref:     (1, Cin, H*W)         channels on sublanes, pixels on lanes
    s1_ref:    (Cin, 1)              folded BN1 scale
    b1_ref:    (Cin, 1)              folded BN1 bias
    w1s_ref:   (Cmid, Cin)           1x1 conv weight with BN2 scale folded in
    b2_ref:    (Cmid, 1)             folded BN2 bias
    w2_ref:    (3, Cout, 3*Cmid)     3x3 weight repacked per kernel row
    wmask_ref: (3, 1, H*W)           left/right border masks for ox = -1, 0, +1
    o_ref:     (1, Cout, H*W)        output block (accumulated in VMEM)
    mid_ref:   (Cmid, H*W + 2*(W+1)) VMEM scratch: bottleneck output + zero halo
    """
    HW = H * W
    PAD = W + 1

    # ---- BN1 -> ReLU -> 1x1 conv (BN2 scale pre-folded) -> +b2 -> ReLU ------
    x = x_ref[0]                                               # (Cin, HW)
    a = jnp.maximum(x * s1_ref[...] + b1_ref[...], 0.0)
    mid = jnp.dot(w1s_ref[...], a.astype(w1s_ref.dtype),
                  preferred_element_type=jnp.float32)          # (Cmid, HW)
    mid = jnp.maximum(mid + b2_ref[...], 0.0)

    # Keep the bottleneck activation resident in VMEM with a zero halo of
    # W+1 lanes on each side (this *is* conv2's padding=1 — no jnp.pad, no
    # HBM round-trip).
    mid_ref[...] = jnp.zeros_like(mid_ref)
    mid_ref[:, pl.ds(PAD, HW)] = mid

    # ---- 3x3 conv: 3 matmuls (one per kernel row).  The 3 horizontal taps are
    # folded into the contraction dim via lane-shifted contiguous slabs of the
    # haloed scratch; border columns are masked. -------------------------------
    for r, oy in enumerate((-1, 0, 1)):
        slabs = []
        for c, ox in enumerate((-1, 0, 1)):
            start = PAD + oy * W + ox                          # static offset
            slab = mid_ref[:, pl.ds(start, HW)]                # (Cmid, HW)
            if ox != 0:
                slab = slab * wmask_ref[c]                     # zero invalid w+ox
            slabs.append(slab)
        patch = jnp.concatenate(slabs, axis=0).astype(w2_ref.dtype)  # (3*Cmid, HW)
        contrib = jnp.dot(w2_ref[r], patch,
                          preferred_element_type=jnp.float32)        # (Cout, HW)
        if r == 0:
            o_ref[0] = contrib
        else:
            o_ref[0] += contrib


def dense_layer_forward(x_nchw, params, *, matmul_dtype=jnp.float32):
    """x_nchw: (N, Cin, H, W) float32.  Returns (N, growth_rate, H, W)."""
    N, Cin, H, W = x_nchw.shape
    HW = H * W
    w1 = params["w1"]          # (Cmid, Cin, 1, 1)
    w2 = params["w2"]          # (Cout, Cmid, 3, 3)
    Cmid = w1.shape[0]
    Cout = w2.shape[0]
    eps = 1e-5

    # Fold BN into per-channel scale/bias (inference-mode BN).
    s1 = params["gamma1"] / jnp.sqrt(params["var1"] + eps)
    b1 = params["beta1"] - params["mean1"] * s1
    s2 = params["gamma2"] / jnp.sqrt(params["var2"] + eps)
    b2 = params["beta2"] - params["mean2"] * s2

    # NCHW is already channels-on-sublanes / pixels-on-lanes: just flatten.
    x_rows = x_nchw.reshape(N, Cin, HW)

    # Fold BN2 scale into the 1x1 conv weight (one-time wrapper cost).
    w1s = (s2[:, None] * w1[:, :, 0, 0]).astype(matmul_dtype)   # (Cmid, Cin)
    s1c = s1.reshape(Cin, 1)
    b1c = b1.reshape(Cin, 1)
    b2c = b2.reshape(Cmid, 1)

    # 3x3 weight repacked per kernel row: (KH, Cout, KW*Cmid); kw is the major
    # index of the contraction dim, matching the slab concatenation order.
    w2_rows = jnp.transpose(w2, (2, 0, 3, 1)).reshape(3, Cout, 3 * Cmid)
    w2_rows = w2_rows.astype(matmul_dtype)

    # Left/right image-border validity masks for the three horizontal taps.
    w_idx = jnp.arange(HW, dtype=jnp.int32) % W
    wmask = jnp.stack([
        (w_idx >= 1).astype(jnp.float32),          # ox = -1: needs w-1 >= 0
        jnp.ones((HW,), jnp.float32),              # ox =  0: always valid
        (w_idx <= W - 2).astype(jnp.float32),      # ox = +1: needs w+1 <  W
    ]).reshape(3, 1, HW)

    flops = (2 * N * HW * Cin * Cmid
             + 2 * N * HW * (9 * Cmid) * Cout
             + 4 * N * HW * (Cin + Cmid))
    bytes_accessed = (4 * (N * Cin * HW + N * Cout * HW)
                      + 4 * (Cmid * Cin + 9 * Cout * Cmid
                             + 2 * Cin + Cmid + 3 * HW))

    out = pl.pallas_call(
        functools.partial(_dense_layer_kernel, H=H, W=W),
        out_shape=jax.ShapeDtypeStruct((N, Cout, HW), jnp.float32),
        grid_spec=pltpu.PrefetchScalarGridSpec(
            num_scalar_prefetch=0,
            grid=(N,),
            in_specs=[
                pl.BlockSpec((1, Cin, HW), lambda n: (n, 0, 0)),
                pl.BlockSpec((Cin, 1), lambda n: (0, 0)),
                pl.BlockSpec((Cin, 1), lambda n: (0, 0)),
                pl.BlockSpec((Cmid, Cin), lambda n: (0, 0)),
                pl.BlockSpec((Cmid, 1), lambda n: (0, 0)),
                pl.BlockSpec((3, Cout, 3 * Cmid), lambda n: (0, 0, 0)),
                pl.BlockSpec((3, 1, HW), lambda n: (0, 0, 0)),
            ],
            out_specs=pl.BlockSpec((1, Cout, HW), lambda n: (n, 0, 0)),
            scratch_shapes=[pltpu.VMEM((Cmid, HW + 2 * (W + 1)), jnp.float32)],
        ),
        compiler_params=pltpu.CompilerParams(
            dimension_semantics=("parallel",),
            vmem_limit_bytes=32 * 1024 * 1024,   # safe on v5e/v6e/v7x
        ),
        cost_estimate=pl.CostEstimate(
            flops=flops, transcendentals=0, bytes_accessed=bytes_accessed),
    )(x_rows, s1c, b1c, w1s, b2c, w2_rows, wmask)

    # (N, Cout, H*W) is already NCHW once reshaped — no transpose needed.
    return out.reshape(N, Cout, H, W)


def reference_forward(x_nchw, params):
    """Pure-JAX reference (lax.conv) for correctness check."""
    eps = 1e-5
    s1 = params["gamma1"] / jnp.sqrt(params["var1"] + eps)
    b1 = params["beta1"] - params["mean1"] * s1
    s2 = params["gamma2"] / jnp.sqrt(params["var2"] + eps)
    b2 = params["beta2"] - params["mean2"] * s2

    def bn(x, s, b):
        return x * s[None, :, None, None] + b[None, :, None, None]

    dn = jax.lax.conv_dimension_numbers(x_nchw.shape, params["w1"].shape,
                                        ("NCHW", "OIHW", "NCHW"))
    h = jax.nn.relu(bn(x_nchw, s1, b1))
    h = jax.lax.conv_general_dilated(h, params["w1"], (1, 1), "VALID",
                                     dimension_numbers=dn)
    h = jax.nn.relu(bn(h, s2, b2))
    dn2 = jax.lax.conv_dimension_numbers(h.shape, params["w2"].shape,
                                         ("NCHW", "OIHW", "NCHW"))
    return jax.lax.conv_general_dilated(h, params["w2"], (1, 1),
                                        ((1, 1), (1, 1)),
                                        dimension_numbers=dn2)


if __name__ == "__main__":
    # Small deterministic config: num_input_features=16, growth_rate=8, bn_size=4
    N, Cin, H, W = 2, 16, 16, 16
    growth_rate, bn_size = 8, 4
    Cmid, Cout = bn_size * growth_rate, growth_rate

    key = jax.random.PRNGKey(0)
    ks = jax.random.split(key, 10)
    params = {
        "gamma1": jax.random.normal(ks[0], (Cin,), jnp.float32) * 0.1 + 1.0,
        "beta1":  jax.random.normal(ks[1], (Cin,), jnp.float32) * 0.1,
        "mean1":  jax.random.normal(ks[2], (Cin,), jnp.float32) * 0.1,
        "var1":   jnp.abs(jax.random.normal(ks[3], (Cin,), jnp.float32)) * 0.1 + 1.0,
        "w1":     jax.random.normal(ks[4], (Cmid, Cin, 1, 1), jnp.float32) * 0.1,
        "gamma2": jax.random.normal(ks[5], (Cmid,), jnp.float32) * 0.1 + 1.0,
        "beta2":  jax.random.normal(ks[6], (Cmid,), jnp.float32) * 0.1,
        "mean2":  jax.random.normal(ks[7], (Cmid,), jnp.float32) * 0.1,
        "var2":   jnp.abs(jax.random.normal(ks[8], (Cmid,), jnp.float32)) * 0.1 + 1.0,
        "w2":     jax.random.normal(ks[9], (Cout, Cmid, 3, 3), jnp.float32) * 0.1,
    }

    x = jax.random.normal(jax.random.PRNGKey(42), (N, Cin, H, W), jnp.float32)

    out = dense_layer_forward(x, params)
    out = jax.block_until_ready(out)

    ref = jax.block_until_ready(reference_forward(x, params))
    assert out.shape == (N, Cout, H, W), out.shape
    assert jnp.allclose(out, ref, atol=1e-4, rtol=1e-4), \
        float(jnp.max(jnp.abs(out - ref)))

    print("KERNEL_OK")
</pallas_src>

<mosaic_0001>
module attributes {stable_mosaic.version = 11 : i64} {
  func.func @_dense_layer_kernel(%arg0: i32, %arg1: memref<1x16x256xf32, #tpu.memory_space<vmem>>, %arg2: memref<16x1xf32, #tpu.memory_space<vmem>>, %arg3: memref<16x1xf32, #tpu.memory_space<vmem>>, %arg4: memref<32x16xf32, #tpu.memory_space<vmem>>, %arg5: memref<32x1xf32, #tpu.memory_space<vmem>>, %arg6: memref<3x8x96xf32, #tpu.memory_space<vmem>>, %arg7: memref<3x1x256xf32, #tpu.memory_space<vmem>>, %arg8: memref<1x8x256xf32, #tpu.memory_space<vmem>>, %arg9: memref<32x290xf32, #tpu.memory_space<vmem>>) attributes {dimension_semantics = [#tpu.dimension_semantics<parallel>], iteration_bounds = array<i64: 2>, scalar_prefetch = 0 : i64, scratch_operands = 1 : i64, tpu.core_type = #tpu.core_type<tc>, window_params = [{transform_indices = @transform_0, window_bounds = array<i64: 1, 16, 256>}, {pipeline_mode = #tpu.pipeline_mode<synchronous>, transform_indices = @transform_1, window_bounds = array<i64: 16, 1>}, {pipeline_mode = #tpu.pipeline_mode<synchronous>, transform_indices = @transform_2, window_bounds = array<i64: 16, 1>}, {pipeline_mode = #tpu.pipeline_mode<synchronous>, transform_indices = @transform_3, window_bounds = array<i64: 32, 16>}, {pipeline_mode = #tpu.pipeline_mode<synchronous>, transform_indices = @transform_4, window_bounds = array<i64: 32, 1>}, {pipeline_mode = #tpu.pipeline_mode<synchronous>, transform_indices = @transform_5, window_bounds = array<i64: 3, 8, 96>}, {pipeline_mode = #tpu.pipeline_mode<synchronous>, transform_indices = @transform_6, window_bounds = array<i64: 3, 1, 256>}, {transform_indices = @transform_7, window_bounds = array<i64: 1, 8, 256>}]} {
    %c0 = arith.constant 0 : index
    %c0_0 = arith.constant 0 : index
    %c0_1 = arith.constant 0 : index
    %0 = vector.load %arg1[%c0, %c0_0, %c0_1] : memref<1x16x256xf32, #tpu.memory_space<vmem>>, vector<1x16x256xf32>
    %1 = vector.shape_cast %0 : vector<1x16x256xf32> to vector<16x256xf32>
    %c0_2 = arith.constant 0 : index
    %c0_3 = arith.constant 0 : index
    %2 = vector.load %arg2[%c0_2, %c0_3] : memref<16x1xf32, #tpu.memory_space<vmem>>, vector<16x1xf32>
    %3 = vector.broadcast %2 : vector<16x1xf32> to vector<16x256xf32>
    %4 = arith.mulf %1, %3 : vector<16x256xf32>
    %c0_4 = arith.constant 0 : index
    %c0_5 = arith.constant 0 : index
    %5 = vector.load %arg3[%c0_4, %c0_5] : memref<16x1xf32, #tpu.memory_space<vmem>>, vector<16x1xf32>
    %6 = vector.broadcast %5 : vector<16x1xf32> to vector<16x256xf32>
    %7 = arith.addf %4, %6 : vector<16x256xf32>
    %cst = arith.constant 0.000000e+00 : f32
    %8 = vector.broadcast %cst : f32 to vector<16x256xf32>
    %9 = arith.maximumf %7, %8 : vector<16x256xf32>
    %c0_6 = arith.constant 0 : index
    %c0_7 = arith.constant 0 : index
    %10 = vector.load %arg4[%c0_6, %c0_7] : memref<32x16xf32, #tpu.memory_space<vmem>>, vector<32x16xf32>
    %cst_8 = arith.constant dense<0.000000e+00> : vector<32x256xf32>
    %11 = tpu.matmul %10, %9, %cst_8 {dimension_numbers = #tpu.dot_dimension_numbers<[1], [0], [0], [1], [0, 0, 1, 1], [], []>} : vector<32x16xf32>, vector<16x256xf32>, vector<32x256xf32> -> vector<32x256xf32>
    %c0_9 = arith.constant 0 : index
    %c0_10 = arith.constant 0 : index
    %12 = vector.load %arg5[%c0_9, %c0_10] : memref<32x1xf32, #tpu.memory_space<vmem>>, vector<32x1xf32>
    %13 = vector.broadcast %12 : vector<32x1xf32> to vector<32x256xf32>
    %14 = arith.addf %11, %13 : vector<32x256xf32>
    %cst_11 = arith.constant 0.000000e+00 : f32
    %15 = vector.broadcast %cst_11 : f32 to vector<32x256xf32>
    %16 = arith.maximumf %14, %15 : vector<32x256xf32>
    %cst_12 = arith.constant 0.000000e+00 : f32
    %17 = vector.broadcast %cst_12 : f32 to vector<32x290xf32>
    %c0_13 = arith.constant 0 : index
    %c0_14 = arith.constant 0 : index
    %18 = vector.load %arg9[%c0_13, %c0_14] : memref<32x290xf32, #tpu.memory_space<vmem>>, vector<32x290xf32>
    tpu.vector_store %arg9[%c0_13, %c0_14], %17 {strides = array<i32>} : memref<32x290xf32, #tpu.memory_space<vmem>>, vector<32x290xf32>,
    %c0_15 = arith.constant 0 : index
    %c17 = arith.constant 17 : index
    %19 = vector.load %arg9[%c0_15, %c17] : memref<32x290xf32, #tpu.memory_space<vmem>>, vector<32x256xf32>
    tpu.vector_store %arg9[%c0_15, %c17], %16 {strides = array<i32>} : memref<32x290xf32, #tpu.memory_space<vmem>>, vector<32x256xf32>,
    %c0_16 = arith.constant 0 : index
    %c0_17 = arith.constant 0 : index
    %20 = vector.load %arg9[%c0_16, %c0_17] : memref<32x290xf32, #tpu.memory_space<vmem>>, vector<32x256xf32>
    %c0_18 = arith.constant 0 : index
    %c0_19 = arith.constant 0 : index
    %c0_20 = arith.constant 0 : index
    %21 = vector.load %arg7[%c0_18, %c0_19, %c0_20] : memref<3x1x256xf32, #tpu.memory_space<vmem>>, vector<1x1x256xf32>
    %22 = vector.shape_cast %21 : vector<1x1x256xf32> to vector<1x256xf32>
    %23 = vector.broadcast %22 : vector<1x256xf32> to vector<32x256xf32>
    %24 = arith.mulf %20, %23 : vector<32x256xf32>
    %c0_21 = arith.constant 0 : index
    %c1 = arith.constant 1 : index
    %25 = vector.load %arg9[%c0_21, %c1] : memref<32x290xf32, #tpu.memory_space<vmem>>, vector<32x256xf32>
    %c0_22 = arith.constant 0 : index
    %c2 = arith.constant 2 : index
    %26 = vector.load %arg9[%c0_22, %c2] : memref<32x290xf32, #tpu.memory_space<vmem>>, vector<32x256xf32>
    %c2_23 = arith.constant 2 : index
    %c0_24 = arith.constant 0 : index
    %c0_25 = arith.constant 0 : index
    %27 = vector.load %arg7[%c2_23, %c0_24, %c0_25] : memref<3x1x256xf32, #tpu.memory_space<vmem>>, vector<1x1x256xf32>
    %28 = vector.shape_cast %27 : vector<1x1x256xf32> to vector<1x256xf32>
    %29 = vector.broadcast %28 : vector<1x256xf32> to vector<32x256xf32>
    %30 = arith.mulf %26, %29 : vector<32x256xf32>
    %31 = tpu.concatenate %24, %25, %30 in 0 : vector<32x256xf32>, vector<32x256xf32>, vector<32x256xf32> -> vector<96x256xf32>
    %c0_26 = arith.constant 0 : index
    %c0_27 = arith.constant 0 : index
    %c0_28 = arith.constant 0 : index
    %32 = vector.load %arg6[%c0_26, %c0_27, %c0_28] : memref<3x8x96xf32, #tpu.memory_space<vmem>>, vector<1x8x96xf32>
    %33 = vector.shape_cast %32 : vector<1x8x96xf32> to vector<8x96xf32>
    %cst_29 = arith.constant dense<0.000000e+00> : vector<8x256xf32>
    %34 = tpu.matmul %33, %31, %cst_29 {dimension_numbers = #tpu.dot_dimension_numbers<[1], [0], [0], [1], [0, 0, 1, 1], [], []>} : vector<8x96xf32>, vector<96x256xf32>, vector<8x256xf32> -> vector<8x256xf32>
    %c0_30 = arith.constant 0 : index
    %c0_31 = arith.constant 0 : index
    %c0_32 = arith.constant 0 : index
    %35 = vector.load %arg8[%c0_30, %c0_31, %c0_32] : memref<1x8x256xf32, #tpu.memory_space<vmem>>, vector<1x8x256xf32>
    %36 = vector.shape_cast %35 : vector<1x8x256xf32> to vector<8x256xf32>
    %37 = vector.shape_cast %34 : vector<8x256xf32> to vector<1x8x256xf32>
    tpu.vector_store %arg8[%c0_30, %c0_31, %c0_32], %37 {strides = array<i32>} : memref<1x8x256xf32, #tpu.memory_space<vmem>>, vector<1x8x256xf32>,
    %c0_33 = arith.constant 0 : index
    %c16 = arith.constant 16 : index
    %38 = vector.load %arg9[%c0_33, %c16] : memref<32x290xf32, #tpu.memory_space<vmem>>, vector<32x256xf32>
    %c0_34 = arith.constant 0 : index
    %c0_35 = arith.constant 0 : index
    %c0_36 = arith.constant 0 : index
    %39 = vector.load %arg7[%c0_34, %c0_35, %c0_36] : memref<3x1x256xf32, #tpu.memory_space<vmem>>, vector<1x1x256xf32>
    %40 = vector.shape_cast %39 : vector<1x1x256xf32> to vector<1x256xf32>
    %41 = vector.broadcast %40 : vector<1x256xf32> to vector<32x256xf32>
    %42 = arith.mulf %38, %41 : vector<32x256xf32>
    %c0_37 = arith.constant 0 : index
    %c17_38 = arith.constant 17 : index
    %43 = vector.load %arg9[%c0_37, %c17_38] : memref<32x290xf32, #tpu.memory_space<vmem>>, vector<32x256xf32>
    %c0_39 = arith.constant 0 : index
    %c18 = arith.constant 18 : index
    %44 = vector.load %arg9[%c0_39, %c18] : memref<32x290xf32, #tpu.memory_space<vmem>>, vector<32x256xf32>
    %c2_40 = arith.constant 2 : index
    %c0_41 = arith.constant 0 : index
    %c0_42 = arith.constant 0 : index
    %45 = vector.load %arg7[%c2_40, %c0_41, %c0_42] : memref<3x1x256xf32, #tpu.memory_space<vmem>>, vector<1x1x256xf32>
    %46 = vector.shape_cast %45 : vector<1x1x256xf32> to vector<1x256xf32>
    %47 = vector.broadcast %46 : vector<1x256xf32> to vector<32x256xf32>
    %48 = arith.mulf %44, %47 : vector<32x256xf32>
    %49 = tpu.concatenate %42, %43, %48 in 0 : vector<32x256xf32>, vector<32x256xf32>, vector<32x256xf32> -> vector<96x256xf32>
    %c1_43 = arith.constant 1 : index
    %c0_44 = arith.constant 0 : index
    %c0_45 = arith.constant 0 : index
    %50 = vector.load %arg6[%c1_43, %c0_44, %c0_45] : memref<3x8x96xf32, #tpu.memory_space<vmem>>, vector<1x8x96xf32>
    %51 = vector.shape_cast %50 : vector<1x8x96xf32> to vector<8x96xf32>
    %cst_46 = arith.constant dense<0.000000e+00> : vector<8x256xf32>
    %52 = tpu.matmul %51, %49, %cst_46 {dimension_numbers = #tpu.dot_dimension_numbers<[1], [0], [0], [1], [0, 0, 1, 1], [], []>} : vector<8x96xf32>, vector<96x256xf32>, vector<8x256xf32> -> vector<8x256xf32>
    %c0_47 = arith.constant 0 : index
    %c0_48 = arith.constant 0 : index
    %c0_49 = arith.constant 0 : index
    %53 = vector.load %arg8[%c0_47, %c0_48, %c0_49] : memref<1x8x256xf32, #tpu.memory_space<vmem>>, vector<1x8x256xf32>
    %54 = vector.shape_cast %53 : vector<1x8x256xf32> to vector<8x256xf32>
    %55 = arith.addf %54, %52 : vector<8x256xf32>
    %c0_50 = arith.constant 0 : index
    %c0_51 = arith.constant 0 : index
    %c0_52 = arith.constant 0 : index
    %56 = vector.load %arg8[%c0_50, %c0_51, %c0_52] : memref<1x8x256xf32, #tpu.memory_space<vmem>>, vector<1x8x256xf32>
    %57 = vector.shape_cast %56 : vector<1x8x256xf32> to vector<8x256xf32>
    %58 = vector.shape_cast %55 : vector<8x256xf32> to vector<1x8x256xf32>
    tpu.vector_store %arg8[%c0_50, %c0_51, %c0_52], %58 {strides = array<i32>} : memref<1x8x256xf32, #tpu.memory_space<vmem>>, vector<1x8x256xf32>,
    %c0_53 = arith.constant 0 : index
    %c32 = arith.constant 32 : index
    %59 = vector.load %arg9[%c0_53, %c32] : memref<32x290xf32, #tpu.memory_space<vmem>>, vector<32x256xf32>
    %c0_54 = arith.constant 0 : index
    %c0_55 = arith.constant 0 : index
    %c0_56 = arith.constant 0 : index
    %60 = vector.load %arg7[%c0_54, %c0_55, %c0_56] : memref<3x1x256xf32, #tpu.memory_space<vmem>>, vector<1x1x256xf32>
    %61 = vector.shape_cast %60 : vector<1x1x256xf32> to vector<1x256xf32>
    %62 = vector.broadcast %61 : vector<1x256xf32> to vector<32x256xf32>
    %63 = arith.mulf %59, %62 : vector<32x256xf32>
    %c0_57 = arith.constant 0 : index
    %c33 = arith.constant 33 : index
    %64 = vector.load %arg9[%c0_57, %c33] : memref<32x290xf32, #tpu.memory_space<vmem>>, vector<32x256xf32>
    %c0_58 = arith.constant 0 : index
    %c34 = arith.constant 34 : index
    %65 = vector.load %arg9[%c0_58, %c34] : memref<32x290xf32, #tpu.memory_space<vmem>>, vector<32x256xf32>
    %c2_59 = arith.constant 2 : index
    %c0_60 = arith.constant 0 : index
    %c0_61 = arith.constant 0 : index
    %66 = vector.load %arg7[%c2_59, %c0_60, %c0_61] : memref<3x1x256xf32, #tpu.memory_space<vmem>>, vector<1x1x256xf32>
    %67 = vector.shape_cast %66 : vector<1x1x256xf32> to vector<1x256xf32>
    %68 = vector.broadcast %67 : vector<1x256xf32> to vector<32x256xf32>
    %69 = arith.mulf %65, %68 : vector<32x256xf32>
    %70 = tpu.concatenate %63, %64, %69 in 0 : vector<32x256xf32>, vector<32x256xf32>, vector<32x256xf32> -> vector<96x256xf32>
    %c2_62 = arith.constant 2 : index
    %c0_63 = arith.constant 0 : index
    %c0_64 = arith.constant 0 : index
    %71 = vector.load %arg6[%c2_62, %c0_63, %c0_64] : memref<3x8x96xf32, #tpu.memory_space<vmem>>, vector<1x8x96xf32>
    %72 = vector.shape_cast %71 : vector<1x8x96xf32> to vector<8x96xf32>
    %cst_65 = arith.constant dense<0.000000e+00> : vector<8x256xf32>
    %73 = tpu.matmul %72, %70, %cst_65 {dimension_numbers = #tpu.dot_dimension_numbers<[1], [0], [0], [1], [0, 0, 1, 1], [], []>} : vector<8x96xf32>, vector<96x256xf32>, vector<8x256xf32> -> vector<8x256xf32>
    %c0_66 = arith.constant 0 : index
    %c0_67 = arith.constant 0 : index
    %c0_68 = arith.constant 0 : index
    %74 = vector.load %arg8[%c0_66, %c0_67, %c0_68] : memref<1x8x256xf32, #tpu.memory_space<vmem>>, vector<1x8x256xf32>
    %75 = vector.shape_cast %74 : vector<1x8x256xf32> to vector<8x256xf32>
    %76 = arith.addf %75, %73 : vector<8x256xf32>
    %c0_69 = arith.constant 0 : index
    %c0_70 = arith.constant 0 : index
    %c0_71 = arith.constant 0 : index
    %77 = vector.load %arg8[%c0_69, %c0_70, %c0_71] : memref<1x8x256xf32, #tpu.memory_space<vmem>>, vector<1x8x256xf32>
    %78 = vector.shape_cast %77 : vector<1x8x256xf32> to vector<8x256xf32>
    %79 = vector.shape_cast %76 : vector<8x256xf32> to vector<1x8x256xf32>
    tpu.vector_store %arg8[%c0_69, %c0_70, %c0_71], %79 {strides = array<i32>} : memref<1x8x256xf32, #tpu.memory_space<vmem>>, vector<1x8x256xf32>,
    return
  }
  func.func @transform_0(%arg0: i32) -> (i32, i32, i32) {
    %c0_i32 = arith.constant 0 : i32
    %c0_i32_0 = arith.constant 0 : i32
    %c0_i32_1 = arith.constant 0 : i32
    return %arg0, %c0_i32, %c0_i32_0 : i32, i32, i32
  }
  func.func @transform_1(%arg0: i32) -> (i32, i32) {
    %c0_i32 = arith.constant 0 : i32
    %c0_i32_0 = arith.constant 0 : i32
    %c0_i32_1 = arith.constant 0 : i32
    return %c0_i32, %c0_i32_0 : i32, i32
  }
  func.func @transform_2(%arg0: i32) -> (i32, i32) {
    %c0_i32 = arith.constant 0 : i32
    %c0_i32_0 = arith.constant 0 : i32
    %c0_i32_1 = arith.constant 0 : i32
    return %c0_i32, %c0_i32_0 : i32, i32
  }
  func.func @transform_3(%arg0: i32) -> (i32, i32) {
    %c0_i32 = arith.constant 0 : i32
    %c0_i32_0 = arith.constant 0 : i32
    %c0_i32_1 = arith.constant 0 : i32
    return %c0_i32, %c0_i32_0 : i32, i32
  }
  func.func @transform_4(%arg0: i32) -> (i32, i32) {
    %c0_i32 = arith.constant 0 : i32
    %c0_i32_0 = arith.constant 0 : i32
    %c0_i32_1 = arith.constant 0 : i32
    return %c0_i32, %c0_i32_0 : i32, i32
  }
  func.func @transform_5(%arg0: i32) -> (i32, i32, i32) {
    %c0_i32 = arith.constant 0 : i32
    %c0_i32_0 = arith.constant 0 : i32
    %c0_i32_1 = arith.constant 0 : i32
    %c0_i32_2 = arith.constant 0 : i32
    return %c0_i32, %c0_i32_0, %c0_i32_1 : i32, i32, i32
  }
  func.func @transform_6(%arg0: i32) -> (i32, i32, i32) {
    %c0_i32 = arith.constant 0 : i32
    %c0_i32_0 = arith.constant 0 : i32
    %c0_i32_1 = arith.constant 0 : i32
    %c0_i32_2 = arith.constant 0 : i32
    return %c0_i32, %c0_i32_0, %c0_i32_1 : i32, i32, i32
  }
  func.func @transform_7(%arg0: i32) -> (i32, i32, i32) {
    %c0_i32 = arith.constant 0 : i32
    %c0_i32_0 = arith.constant 0 : i32
    %c0_i32_1 = arith.constant 0 : i32
    return %arg0, %c0_i32, %c0_i32_0 : i32, i32, i32
  }
}

</mosaic_0001>

<llo_original>
// kernel: tpu_custom_call.1
$region0: #{tpu_custom_call.1}
  #allocation0 [shape = 'u32[]', space=smem, size = 0x4, offset = 0x4, fixed_abs, tag = 'smem constant byte address 0x4 - core index']
  #allocation1 [shape = 'u32[144,128]{1,0:T(1,128)}', space=vmem, size = 0x12000, scoped, tag = 'internal scratch']
  #allocation2 [shape = 'f32[32,290]{1,0:T(8,128)}', space=vmem, size = 0xc000, scoped, tag = 'scratch operand']
  %s0 = inlined_call_operand.vmem [shape: f32[2,16,256], index: 0, kind: input, shape index: {}]
  %s1 = inlined_call_operand.vmem [shape: f32[16,1], index: 1, kind: input, shape index: {}]
  %s2 = inlined_call_operand.vmem [shape: f32[16,1], index: 2, kind: input, shape index: {}]
  %s3 = inlined_call_operand.vmem [shape: f32[32,16], index: 3, kind: input, shape index: {}]
  %s4 = inlined_call_operand.vmem [shape: f32[32,1], index: 4, kind: input, shape index: {}]
  %s5 = inlined_call_operand.vmem [shape: f32[3,8,96], index: 5, kind: input, shape index: {}]
  %s6 = inlined_call_operand.vmem [shape: f32[3,1,256], index: 6, kind: input, shape index: {}]
  %s7 = inlined_call_operand.hbm [shape: f32[2,8,256], index: 7, kind: output, shape index: {}]
  %s8 = sld [smem:[#allocation0]]
  $region61: #{tpu_custom_call.1} parent=0
    _
  %s10 = ssub.s32 1, %s8
  %s11 = scalar_select 0, %s10, %s8
  $region1: #{tpu_custom_call.1} parent=0
    #allocation3 [shape = 'u8[16384]{0}', space=vmem, size = 0x4000, scoped, tag = 'output window, operand 0']
    #allocation4 [shape = 's32[2]{0}', space=sflag, size = 0x8, scoped, tag = 'scoped memory for tpu_custom_call.1']
    %12 = vsyncpa [#allocation4], 0
    %s13 = scalar_lea.sflag [#allocation4], 1
    %14 = vsyncpa %s13, 0
    loop: start=0, step=1, limit=4
    $region2: #{tpu_custom_call.1} parent=1 // loop_pre_header
      _
    $region3: #{tpu_custom_call.1} parent=1 // loop_header
      %s16 = sphi 0, %s20
      %p17 = scmp.ge.s32.totalorder %s16, 4
      %s26 = sphi 0, %s28
      %s29 = sphi 0, %s26
      %s30 = sphi 0, %s29
      %s46 = sphi 0, %s30
      %s50 = sphi 0, %s50
      %s52 = sphi 0, %s50
      %s53 = sphi 0, %s52
      %s67 = sphi 0, %s53
      %s71 = sphi 0, %s71
      %s73 = sphi 0, %s71
      %s74 = sphi 0, %s73
      %s88 = sphi 0, %s74
      %s92 = sphi 0, %s92
      %s94 = sphi 0, %s92
      %s95 = sphi 0, %s94
      %s109 = sphi 0, %s95
      %s113 = sphi 0, %s113
      %s115 = sphi 0, %s113
      %s116 = sphi 0, %s115
      %s130 = sphi 0, %s116
      %s134 = sphi 0, %s134
      %s136 = sphi 0, %s134
      %s137 = sphi 0, %s136
      %s151 = sphi 0, %s137
      %s155 = sphi 0, %s155
      %s157 = sphi 0, %s155
      %s158 = sphi 0, %s157
      %s172 = sphi 0, %s158
      %s178 = sphi 0, %s180
      %s181 = sphi 0, %s178
      %s182 = sphi 0, %s181
      %s198 = sphi 0, %s182
    $region4: #{tpu_custom_call.1} parent=1 // loop_header_branch
      %19 = sbr.rel (%p17) target = $region8
    $region5: #{tpu_custom_call.1} parent=1 // loop_body
      %s21 = ssub.s32 %s16, 1
      %s22 = ssub.s32 %s16, 2
      %s23 = sadd.s32 %s16, 1
      %s24 = ssub.s32 %s16, %s23
      %p25 = scmp.eq.s32.totalorder %s24, 0
      %s27 = sadd.s32 %s26, 1
      %s28 = scalar_select %p25, %s26, %s27
      %p31 = pneg %p25
      %p32 = scmp.eq.s32.totalorder %s16, 1
      %p33 = por %p31, %p32
      %p34 = scmp.ne.s32.totalorder %s26, %s29
      %p35 = scmp.eq.s32.totalorder %s16, 0
      %p36 = por %p34, %p35
      %p37 = scmp.ne.s32.totalorder %s26, %s29
      %p38 = scmp.eq.s32.totalorder %s21, 1
      %p39 = por %p37, %p38
      %p40 = scmp.ne.s32.totalorder %s29, %s30
      %p41 = scmp.eq.s32.totalorder %s21, 0
      %p42 = por %p40, %p41
      %p43 = scmp.ne.s32.totalorder %s29, %s30
      %p44 = scmp.eq.s32.totalorder %s22, 1
      %p45 = por %p43, %p44
      %p47 = scmp.ne.s32.totalorder %s30, %s46
      %p48 = scmp.eq.s32.totalorder %s22, 0
      %p49 = por %p47, %p48
      %s51 = sadd.s32 %s50, 1
      %p54 = scmp.eq.s32.totalorder %s16, 1
      %p55 = scmp.ne.s32.totalorder %s50, %s52
      %p56 = scmp.eq.s32.totalorder %s16, 0
      %p57 = por %p55, %p56
      %p58 = scmp.ne.s32.totalorder %s50, %s52
      %p59 = scmp.eq.s32.totalorder %s21, 1
      %p60 = por %p58, %p59
      %p61 = scmp.ne.s32.totalorder %s52, %s53
      %p62 = scmp.eq.s32.totalorder %s21, 0
      %p63 = por %p61, %p62
      %p64 = scmp.ne.s32.totalorder %s52, %s53
      %p65 = scmp.eq.s32.totalorder %s22, 1
      %p66 = por %p64, %p65
      %p68 = scmp.ne.s32.totalorder %s53, %s67
      %p69 = scmp.eq.s32.totalorder %s22, 0
      %p70 = por %p68, %p69
      %s72 = sadd.s32 %s71, 1
      %p75 = scmp.eq.s32.totalorder %s16, 1
      %p76 = scmp.ne.s32.totalorder %s71, %s73
      %p77 = scmp.eq.s32.totalorder %s16, 0
      %p78 = por %p76, %p77
      %p79 = scmp.ne.s32.totalorder %s71, %s73
      %p80 = scmp.eq.s32.totalorder %s21, 1
      %p81 = por %p79, %p80
      %p82 = scmp.ne.s32.totalorder %s73, %s74
      %p83 = scmp.eq.s32.totalorder %s21, 0
      %p84 = por %p82, %p83
      %p85 = scmp.ne.s32.totalorder %s73, %s74
      %p86 = scmp.eq.s32.totalorder %s22, 1
      %p87 = por %p85, %p86
      %p89 = scmp.ne.s32.totalorder %s74, %s88
      %p90 = scmp.eq.s32.totalorder %s22, 0
      %p91 = por %p89, %p90
      %s93 = sadd.s32 %s92, 1
      %p96 = scmp.eq.s32.totalorder %s16, 1
      %p97 = scmp.ne.s32.totalorder %s92, %s94
      %p98 = scmp.eq.s32.totalorder %s16, 0
      %p99 = por %p97, %p98
      %p100 = scmp.ne.s32.totalorder %s92, %s94
      %p101 = scmp.eq.s32.totalorder %s21, 1
      %p102 = por %p100, %p101
      %p103 = scmp.ne.s32.totalorder %s94, %s95
      %p104 = scmp.eq.s32.totalorder %s21, 0
      %p105 = por %p103, %p104
      %p106 = scmp.ne.s32.totalorder %s94, %s95
      %p107 = scmp.eq.s32.totalorder %s22, 1
      %p108 = por %p106, %p107
      %p110 = scmp.ne.s32.totalorder %s95, %s109
      %p111 = scmp.eq.s32.totalorder %s22, 0
      %p112 = por %p110, %p111
      %s114 = sadd.s32 %s113, 1
      %p117 = scmp.eq.s32.totalorder %s16, 1
      %p118 = scmp.ne.s32.totalorder %s113, %s115
      %p119 = scmp.eq.s32.totalorder %s16, 0
      %p120 = por %p118, %p119
      %p121 = scmp.ne.s32.totalorder %s113, %s115
      %p122 = scmp.eq.s32.totalorder %s21, 1
      %p123 = por %p121, %p122
      %p124 = scmp.ne.s32.totalorder %s115, %s116
      %p125 = scmp.eq.s32.totalorder %s21, 0
      %p126 = por %p124, %p125
      %p127 = scmp.ne.s32.totalorder %s115, %s116
      %p128 = scmp.eq.s32.totalorder %s22, 1
      %p129 = por %p127, %p128
      %p131 = scmp.ne.s32.totalorder %s116, %s130
      %p132 = scmp.eq.s32.totalorder %s22, 0
      %p133 = por %p131, %p132
      %s135 = sadd.s32 %s134, 1
      %p138 = scmp.eq.s32.totalorder %s16, 1
      %p139 = scmp.ne.s32.totalorder %s134, %s136
      %p140 = scmp.eq.s32.totalorder %s16, 0
      %p141 = por %p139, %p140
      %p142 = scmp.ne.s32.totalorder %s134, %s136
      %p143 = scmp.eq.s32.totalorder %s21, 1
      %p144 = por %p142, %p143
      %p145 = scmp.ne.s32.totalorder %s136, %s137
      %p146 = scmp.eq.s32.totalorder %s21, 0
      %p147 = por %p145, %p146
      %p148 = scmp.ne.s32.totalorder %s136, %s137
      %p149 = scmp.eq.s32.totalorder %s22, 1
      %p150 = por %p148, %p149
      %p152 = scmp.ne.s32.totalorder %s137, %s151
      %p153 = scmp.eq.s32.totalorder %s22, 0
      %p154 = por %p152, %p153
      %s156 = sadd.s32 %s155, 1
      %p159 = scmp.eq.s32.totalorder %s16, 1
      %p160 = scmp.ne.s32.totalorder %s155, %s157
      %p161 = scmp.eq.s32.totalorder %s16, 0
      %p162 = por %p160, %p161
      %p163 = scmp.ne.s32.totalorder %s155, %s157
      %p164 = scmp.eq.s32.totalorder %s21, 1
      %p165 = por %p163, %p164
      %p166 = scmp.ne.s32.totalorder %s157, %s158
      %p167 = scmp.eq.s32.totalorder %s21, 0
      %p168 = por %p166, %p167
      %p169 = scmp.ne.s32.totalorder %s157, %s158
      %p170 = scmp.eq.s32.totalorder %s22, 1
      %p171 = por %p169, %p170
      %p173 = scmp.ne.s32.totalorder %s158, %s172
      %p174 = scmp.eq.s32.totalorder %s22, 0
      %p175 = por %p173, %p174
      %s176 = ssub.s32 %s16, %s23
      %p177 = scmp.eq.s32.totalorder %s176, 0
      %s179 = sadd.s32 %s178, 1
      %s180 = scalar_select %p177, %s178, %s179
      %p183 = pneg %p177
      %p184 = scmp.eq.s32.totalorder %s16, 1
      %p185 = por %p183, %p184
      %p186 = scmp.ne.s32.totalorder %s178, %s181
      %p187 = scmp.eq.s32.totalorder %s16, 0
      %p188 = por %p186, %p187
      %p189 = scmp.ne.s32.totalorder %s178, %s181
      %p190 = scmp.eq.s32.totalorder %s21, 1
      %p191 = por %p189, %p190
      %p192 = scmp.ne.s32.totalorder %s181, %s182
      %p193 = scmp.eq.s32.totalorder %s21, 0
      %p194 = por %p192, %p193
      %p195 = scmp.ne.s32.totalorder %s181, %s182
      %p196 = scmp.eq.s32.totalorder %s22, 1
      %p197 = por %p195, %p196
      %p199 = scmp.ne.s32.totalorder %s182, %s198
      %p200 = scmp.eq.s32.totalorder %s22, 0
      %p201 = por %p199, %p200
      %p202 = scmp.le.s32.totalorder 1, %s16
      %p203 = scmp.lt.s32.totalorder %s16, 3
      %p204 = pnand %p202, %p203
      %p205 = pneg %p204
      // Predicated region
      $region9: #{tpu_custom_call.1} parent=5 // pred_check
        _
      $region10: #{tpu_custom_call.1} parent=5 // pred_check_branch
        %207 = sbr.rel (%p204) target = $region12
      $region11: #{tpu_custom_call.1} parent=5 // pred_region
        %s208 = ssub.s32 %s16, 1
        // Predicated region
        $region13: #{tpu_custom_call.1} parent=11 // pred_check
          %p209 = pneg %p63
        $region14: #{tpu_custom_call.1} parent=11 // pred_check_branch
          %211 = sbr.rel (%p209) target = $region16
        $region15: #{tpu_custom_call.1} parent=11 // pred_region
          _
        $region16: #{tpu_custom_call.1} parent=11 // pred_fallthru
          _
        // Predicated region
        $region17: #{tpu_custom_call.1} parent=11 // pred_check
          %p212 = pneg %p84
        $region18: #{tpu_custom_call.1} parent=11 // pred_check_branch
          %214 = sbr.rel (%p212) target = $region20
        $region19: #{tpu_custom_call.1} parent=11 // pred_region
          _
        $region20: #{tpu_custom_call.1} parent=11 // pred_fallthru
          _
        // Predicated region
        $region21: #{tpu_custom_call.1} parent=11 // pred_check
          %p215 = pneg %p105
        $region22: #{tpu_custom_call.1} parent=11 // pred_check_branch
          %217 = sbr.rel (%p215) target = $region24
        $region23: #{tpu_custom_call.1} parent=11 // pred_region
          _
        $region24: #{tpu_custom_call.1} parent=11 // pred_fallthru
          _
        // Predicated region
        $region25: #{tpu_custom_call.1} parent=11 // pred_check
          %p218 = pneg %p126
        $region26: #{tpu_custom_call.1} parent=11 // pred_check_branch
          %220 = sbr.rel (%p218) target = $region28
        $region27: #{tpu_custom_call.1} parent=11 // pred_region
          _
        $region28: #{tpu_custom_call.1} parent=11 // pred_fallthru
          _
        // Predicated region
        $region29: #{tpu_custom_call.1} parent=11 // pred_check
          %p221 = pneg %p147
        $region30: #{tpu_custom_call.1} parent=11 // pred_check_branch
          %223 = sbr.rel (%p221) target = $region32
        $region31: #{tpu_custom_call.1} parent=11 // pred_region
          _
        $region32: #{tpu_custom_call.1} parent=11 // pred_fallthru
          _
        // Predicated region
        $region33: #{tpu_custom_call.1} parent=11 // pred_check
          %p224 = pneg %p168
        $region34: #{tpu_custom_call.1} parent=11 // pred_check_branch
          %226 = sbr.rel (%p224) target = $region36
        $region35: #{tpu_custom_call.1} parent=11 // pred_region
          _
        $region36: #{tpu_custom_call.1} parent=11 // pred_fallthru
          _
      $region12: #{tpu_custom_call.1} parent=5 // pred_fallthru
        _
      %p227 = scmp.lt.s32.totalorder %s16, 2
      // Predicated region
      $region37: #{tpu_custom_call.1} parent=5 // pred_check
        %p228 = pneg %p227
      $region38: #{tpu_custom_call.1} parent=5 // pred_check_branch
        %230 = sbr.rel (%p228) target = $region40
      $region39: #{tpu_custom_call.1} parent=5 // pred_region
        // Predicated region
        $region41: #{tpu_custom_call.1} parent=39 // pred_check
          %p231 = pneg %p36
        $region42: #{tpu_custom_call.1} parent=39 // pred_check_branch
          %233 = sbr.rel (%p231) target = $region44
        $region43: #{tpu_custom_call.1} parent=39 // pred_region
          %p234 = scmp.lt.s32.totalorder %s16, 1
          %s235 = scalar_select %p234, %s16, 1
          %s236 = smul.addr %s235, 4
          %s237 = smul.addr %s236, 8
          %s238 = scalar_lea.vmem %s0, %s237
        $region44: #{tpu_custom_call.1} parent=39 // pred_fallthru
          _
      $region40: #{tpu_custom_call.1} parent=5 // pred_fallthru
        _
      %p239 = scmp.le.s32.totalorder 1, %s16
      %p240 = scmp.lt.s32.totalorder %s16, 3
      %p241 = pnand %p239, %p240
      %p242 = pneg %p241
      // Predicated region
      $region45: #{tpu_custom_call.1} parent=5 // pred_check
        _
      $region46: #{tpu_custom_call.1} parent=5 // pred_check_branch
        %244 = sbr.rel (%p241) target = $region48
      $region47: #{tpu_custom_call.1} parent=5 // pred_region
        %s245 = ssub.s32 %s16, 1
        %p246 = scmp.lt.s32.totalorder %s21, 1
        %s247 = scalar_select %p246, %s21, 1
        %s248 = smul.addr %s247, 4
        %s249 = smul.addr %s248, 8
        %s250 = scalar_lea.vmem %s0, %s249
        %p251 = pneg %p42
        %p252 = pneg %p39
        %p253 = pneg %p63
        %p254 = pneg %p60
        %p255 = pneg %p84
        %p256 = pneg %p81
        %p257 = pneg %p105
        %p258 = pneg %p102
        %p259 = pneg %p126
        %p260 = pneg %p123
        %p261 = pneg %p147
        %p262 = pneg %p144
        %p263 = pneg %p168
        %p264 = pneg %p165
        %p265 = pneg %p194
        %p266 = pneg %p191
        %s267 = sand.u32 %s181, 1
        %s268 = scalar_lea.sflag [#allocation4], %s267
        %s269 = sand.u32 %s181, 1
        %s270 = smul.addr %s269, 16
        %s271 = scalar_lea.vmem [#allocation3], %s270
        %p272 = scmp.lt.s32.totalorder %s21, 1
        %s273 = scalar_select %p272, %s21, 1
        %s274 = smul.addr %s273, 4
        %s275 = smul.addr %s274, 8
        %s276 = scalar_lea.vmem %s0, %s275
        %v277 = vld [vmem:[%s276] sm:$0xff]
        %v278 = vld [vmem:[%s276 + $0x8] sm:$0xff]
        %v279 = vld [vmem:[%s276 + $0x10] sm:$0xff]
        %v280 = vld [vmem:[%s276 + $0x18] sm:$0xff]
        %v281 = vld [vmem:[%s1] sm:$0xff]
        %v282 = vld [vmem:[%s1 + $0x8] sm:$0xff]
        %284 = vset.pattern.permute.xlu0 0
        %285 = vperm.xlu0 %284, %v281
        %v286 = vpop.permute.xlu0 %285
        %289 = vset.pattern.permute.xlu0 0
        %290 = vperm.xlu0 %289, %v282
        %v291 = vpop.permute.xlu0 %290
        %v293 = vmul.f32 %v277, %v286
        %v294 = vmul.f32 %v278, %v286
        %v295 = vmul.f32 %v279, %v291
        %v296 = vmul.f32 %v280, %v291
        %v297 = vld [vmem:[%s2] sm:$0xff]
        %v298 = vld [vmem:[%s2 + $0x8] sm:$0xff]
        %300 = vset.pattern.permute.xlu0 0
        %301 = vperm.xlu0 %300, %v297
        %v302 = vpop.permute.xlu0 %301
        %305 = vset.pattern.permute.xlu0 0
        %306 = vperm.xlu0 %305, %v298
        %v307 = vpop.permute.xlu0 %306
        %v309 = vadd.f32 %v293, %v302
        %v310 = vadd.f32 %v294, %v302
        %v311 = vadd.f32 %v295, %v307
        %v312 = vadd.f32 %v296, %v307
        %v313 = vmax.f32 %v309, 0.0
        %v314 = vmax.f32 %v310, 0.0
        %v315 = vmax.f32 %v311, 0.0
        %v316 = vmax.f32 %v312, 0.0
        %v317 = vld [vmem:[%s3] sm:$0xff]
        %v318 = vld [vmem:[%s3 + $0x8] sm:$0xff]
        %v319 = vld [vmem:[%s3 + $0x10] sm:$0xff]
        %v320 = vld [vmem:[%s3 + $0x18] sm:$0xff]
        %v321 = vld [vmem:[%s4] sm:$0xff]
        %v322 = vld [vmem:[%s4 + $0x8] sm:$0xff]
        %v323 = vld [vmem:[%s4 + $0x10] sm:$0xff]
        %v324 = vld [vmem:[%s4 + $0x18] sm:$0xff]
        %326 = vset.pattern.permute.xlu0 0
        %327 = vperm.xlu0 %326, %v321
        %v328 = vpop.permute.xlu0 %327
        %331 = vset.pattern.permute.xlu0 0
        %332 = vperm.xlu0 %331, %v322
        %v333 = vpop.permute.xlu0 %332
        %336 = vset.pattern.permute.xlu0 0
        %337 = vperm.xlu0 %336, %v323
        %v338 = vpop.permute.xlu0 %337
        %341 = vset.pattern.permute.xlu0 0
        %342 = vperm.xlu0 %341, %v324
        %v343 = vpop.permute.xlu0 %342
        %vm345 = vcmask 130048
        %v347 = vsel %vm345, %v317, 0
        %v350 = vsel %vm345, %v318, 0
        %v353 = vsel %vm345, %v319, 0
        %v356 = vsel %vm345, %v320, 0
        %358 = vmatprep.subr.mxu0 %v314
        %359 = vmatpush1.msra.mxu0 %v313
        %360 = vmatprep.subr.mxu0 %v316
        %361 = vmatpush1.msra.mxu0 %v315
        %362 = vmatprep.subr.mxu0 0.0
        %363 = vmatpush1.msra.mxu0 0.0
        %364 = vmatprep.subr.mxu0 0.0
        %365 = vmatpush1.msra.mxu0 0.0
        %366 = vmatprep.subr.mxu0 0.0
        %367 = vmatpush1.msra.mxu0 0.0
        %368 = vmatprep.subr.mxu0 0.0
        %369 = vmatpush1.msra.mxu0 0.0
        %370 = vmatprep.subr.mxu0 0.0
        %371 = vmatpush1.msra.mxu0 0.0
        %372 = vmatprep.subr.mxu0 0.0
        %373 = vmatpush1.msra.mxu0 0.0
        %374 = vmatprep.subr.mxu0 0.0
        %375 = vmatpush1.msra.mxu0 0.0
        %376 = vmatprep.subr.mxu0 0.0
        %377 = vmatpush1.msra.mxu0 0.0
        %378 = vmatprep.subr.mxu0 0.0
        %379 = vmatpush1.msra.mxu0 0.0
        %380 = vmatprep.subr.mxu0 0.0
        %381 = vmatpush1.msra.mxu0 0.0
        %382 = vmatprep.subr.mxu0 0.0
        %383 = vmatpush1.msra.mxu0 0.0
        %384 = vmatprep.subr.mxu0 0.0
        %385 = vmatpush1.msra.mxu0 0.0
        %386 = vmatprep.subr.mxu0 0.0
        %387 = vmatpush1.msra.mxu0 0.0
        %388 = vmatprep.subr.mxu0 0.0
        %389 = vmatpush1.msra.mxu0 0.0
        %390 = vmatprep.subr.mxu0 0.0
        %391 = vmatpush1.msra.mxu0 0.0
        %392 = vmatprep.subr.mxu0 0.0
        %393 = vmatpush1.msra.mxu0 0.0
        %394 = vmatprep.subr.mxu0 0.0
        %395 = vmatpush1.msra.mxu0 0.0
        %396 = vmatprep.subr.mxu0 0.0
        %397 = vmatpush1.msra.mxu0 0.0
        %398 = vmatprep.subr.mxu0 0.0
        %399 = vmatpush1.msra.mxu0 0.0
        %400 = vmatprep.subr.mxu0 0.0
        %401 = vmatpush1.msra.mxu0 0.0
        %402 = vmatprep.subr.mxu0 0.0
        %403 = vmatpush1.msra.mxu0 0.0
        %404 = vmatprep.subr.mxu0 0.0
        %405 = vmatpush1.msra.mxu0 0.0
        %406 = vmatprep.subr.mxu0 0.0
        %407 = vmatpush1.msra.mxu0 0.0
        %408 = vmatprep.subr.mxu0 0.0
        %409 = vmatpush1.msra.mxu0 0.0
        %410 = vmatprep.subr.mxu0 0.0
        %411 = vmatpush1.msra.mxu0 0.0
        %412 = vmatprep.subr.mxu0 0.0
        %413 = vmatpush1.msra.mxu0 0.0
        %414 = vmatprep.subr.mxu0 0.0
        %415 = vmatpush1.msra.mxu0 0.0
        %416 = vmatprep.subr.mxu0 0.0
        %417 = vmatpush1.msra.mxu0 0.0
        %418 = vmatprep.subr.mxu0 0.0
        %419 = vmatpush1.msra.mxu0 0.0
        %420 = vmatprep.subr.mxu0 0.0
        %421 = vmatpush1.msra.mxu0 0.0
        %422 = vmatprep.mubr.f32.mxu0 0.0
        %423 = vmatmul.mubr.f32.gmra.mrb[0].mxu0 %v347
        %v424 = vpop.f32.mrb[0].mxu0
        %v425 = vadd.f32 %v328, %v424
        %v426 = vpop.f32.mrb[0].mxu0
        %v427 = vadd.f32 %v328, %v426
        %428 = vmatprep.mubr.f32.mxu0 0.0
        %429 = vmatmul.mubr.f32.gmra.mrb[0].mxu0 %v350
        %v430 = vpop.f32.mrb[0].mxu0
        %v431 = vadd.f32 %v333, %v430
        %v432 = vpop.f32.mrb[0].mxu0
        %v433 = vadd.f32 %v333, %v432
        %434 = vmatprep.mubr.f32.mxu0 0.0
        %435 = vmatmul.mubr.f32.gmra.mrb[0].mxu0 %v353
        %v436 = vpop.f32.mrb[0].mxu0
        %v437 = vadd.f32 %v338, %v436
        %v438 = vpop.f32.mrb[0].mxu0
        %v439 = vadd.f32 %v338, %v438
        %440 = vmatprep.mubr.f32.mxu0 0.0
        %441 = vmatmul.mubr.f32.gmra.mrb[0].mxu0 %v356
        %v442 = vpop.f32.mrb[0].mxu0
        %v443 = vadd.f32 %v343, %v442
        %v444 = vpop.f32.mrb[0].mxu0
        %v445 = vadd.f32 %v343, %v444
        %446 = vdwg.mxu0
        %v447 = vmax.f32 %v425, 0.0
        %v448 = vmax.f32 %v427, 0.0
        %v449 = vmax.f32 %v431, 0.0
        %v450 = vmax.f32 %v433, 0.0
        %v451 = vmax.f32 %v437, 0.0
        %v452 = vmax.f32 %v439, 0.0
        %v453 = vmax.f32 %v443, 0.0
        %v454 = vmax.f32 %v445, 0.0
        %455 = vst [vmem:[#allocation2] sm:$0xff] 0.0
        %456 = vst [vmem:[#allocation2 + $0x8] sm:$0xff] 0.0
        %vm457 = vcmask 277504
        %458 = vst.msk [vmem:[#allocation2 + $0x10] sm:$0xff] %vm457, 0.0
        %459 = vst [vmem:[#allocation2 + $0x18] sm:$0xff] 0.0
        %460 = vst [vmem:[#allocation2 + $0x20] sm:$0xff] 0.0
        %461 = vst.msk [vmem:[#allocation2 + $0x28] sm:$0xff] %vm457, 0.0
        %462 = vst [vmem:[#allocation2 + $0x30] sm:$0xff] 0.0
        %463 = vst [vmem:[#allocation2 + $0x38] sm:$0xff] 0.0
        %464 = vst.msk [vmem:[#allocation2 + $0x40] sm:$0xff] %vm457, 0.0
        %465 = vst [vmem:[#allocation2 + $0x48] sm:$0xff] 0.0
        %466 = vst [vmem:[#allocation2 + $0x50] sm:$0xff] 0.0
        %467 = vst.msk [vmem:[#allocation2 + $0x58] sm:$0xff] %vm457, 0.0
        %476 = vrot.lane.b32.xlu0 %v447, 17
        %v477 = vpop.permute.xlu0 %476
        %478 = vrot.lane.b32.xlu0 %v448, 17
        %v479 = vpop.permute.xlu0 %478
        %480 = vrot.lane.b32.xlu0 %v449, 17
        %v481 = vpop.permute.xlu0 %480
        %482 = vrot.lane.b32.xlu0 %v450, 17
        %v483 = vpop.permute.xlu0 %482
        %484 = vrot.lane.b32.xlu0 %v451, 17
        %v485 = vpop.permute.xlu0 %484
        %486 = vrot.lane.b32.xlu0 %v452, 17
        %v487 = vpop.permute.xlu0 %486
        %488 = vrot.lane.b32.xlu0 %v453, 17
        %v489 = vpop.permute.xlu0 %488
        %490 = vrot.lane.b32.xlu0 %v454, 17
        %v491 = vpop.permute.xlu0 %490
        %vm492 = vcmask 138240
        %v493 = vsel %vm492, %v477, %v479
        %v494 = vsel %vm492, %v481, %v483
        %v495 = vsel %vm492, %v485, %v487
        %v496 = vsel %vm492, %v489, %v491
        %vm509 = vcmask 1047688
        %510 = vst.msk [vmem:[#allocation2] sm:$0xff] %vm509, %v477
        %511 = vst [vmem:[#allocation2 + $0x8] sm:$0xff] %v493
        %512 = vst.msk [vmem:[#allocation2 + $0x10] sm:$0xff] %vm492, %v479
        %513 = vst.msk [vmem:[#allocation2 + $0x18] sm:$0xff] %vm509, %v481
        %514 = vst [vmem:[#allocation2 + $0x20] sm:$0xff] %v494
        %515 = vst.msk [vmem:[#allocation2 + $0x28] sm:$0xff] %vm492, %v483
        %516 = vst.msk [vmem:[#allocation2 + $0x30] sm:$0xff] %vm509, %v485
        %517 = vst [vmem:[#allocation2 + $0x38] sm:$0xff] %v495
        %518 = vst.msk [vmem:[#allocation2 + $0x40] sm:$0xff] %vm492, %v487
        %519 = vst.msk [vmem:[#allocation2 + $0x48] sm:$0xff] %vm509, %v489
        %520 = vst [vmem:[#allocation2 + $0x50] sm:$0xff] %v496
        %521 = vst.msk [vmem:[#allocation2 + $0x58] sm:$0xff] %vm492, %v491
        %v522 = vld [vmem:[#allocation2] sm:$0xff]
        %v523 = vld [vmem:[#allocation2 + $0x8] sm:$0xff]
        %v524 = vld [vmem:[#allocation2 + $0x18] sm:$0xff]
        %v525 = vld [vmem:[#allocation2 + $0x20] sm:$0xff]
        %v526 = vld [vmem:[#allocation2 + $0x30] sm:$0xff]
        %v527 = vld [vmem:[#allocation2 + $0x38] sm:$0xff]
        %v528 = vld [vmem:[#allocation2 + $0x48] sm:$0xff]
        %v529 = vld [vmem:[#allocation2 + $0x50] sm:$0xff]
        %v530 = vld [vmem:[%s6] sm:$0x3]
        %v532 = vlaneseq
        %v533 = vshrl.u32 %v532, 7
        %v534 = vsub.s32 0, %v533
        %v535 = vrot.slane %v530, %v534
        %v536 = vlaneseq
        %v537 = vshrl.u32 %v536, 7
        %v538 = vsub.s32 1, %v537
        %v539 = vrot.slane %v530, %v538
        %v542 = vmul.f32 %v522, %v535
        %v543 = vmul.f32 %v523, %v539
        %v544 = vmul.f32 %v524, %v535
        %v545 = vmul.f32 %v525, %v539
        %v546 = vmul.f32 %v526, %v535
        %v547 = vmul.f32 %v527, %v539
        %v548 = vmul.f32 %v528, %v535
        %v549 = vmul.f32 %v529, %v539
        %v550 = vld [vmem:[#allocation2 + $0x10] sm:$0xff]
        %v551 = vld [vmem:[#allocation2 + $0x28] sm:$0xff]
        %v552 = vld [vmem:[#allocation2 + $0x40] sm:$0xff]
        %v553 = vld [vmem:[#allocation2 + $0x58] sm:$0xff]
        %s554 = scalar_lea.vmem %s6, 4
        %v555 = vld [vmem:[%s554] sm:$0x3]
        %v557 = vlaneseq
        %v558 = vshrl.u32 %v557, 7
        %v559 = vsub.s32 0, %v558
        %v560 = vrot.slane %v555, %v559
        %v561 = vlaneseq
        %v562 = vshrl.u32 %v561, 7
        %v563 = vsub.s32 1, %v562
        %v564 = vrot.slane %v555, %v563
        %565 = vrot.lane.b32.xlu0 %v560, 2
        %v566 = vpop.permute.xlu0 %565
        %567 = vrot.lane.b32.xlu0 %v564, 2
        %v568 = vpop.permute.xlu0 %567
        %vm569 = vcmask 15360
        %v570 = vsel %vm569, %v566, %v568
        %v574 = vmul.f32 %v522, %v566
        %v575 = vmul.f32 %v523, %v570
        %v576 = vmul.f32 %v550, %v568
        %v577 = vmul.f32 %v524, %v566
        %v578 = vmul.f32 %v525, %v570
        %v579 = vmul.f32 %v551, %v568
        %v580 = vmul.f32 %v526, %v566
        %v581 = vmul.f32 %v527, %v570
        %v582 = vmul.f32 %v552, %v568
        %v583 = vmul.f32 %v528, %v566
        %v584 = vmul.f32 %v529, %v570
        %v585 = vmul.f32 %v553, %v568
        %598 = vrot.lane.b32.xlu0 %v522, 127
        %v599 = vpop.permute.xlu0 %598
        %600 = vrot.lane.b32.xlu0 %v523, 127
        %v601 = vpop.permute.xlu0 %600
        %602 = vrot.lane.b32.xlu0 %v550, 127
        %v603 = vpop.permute.xlu0 %602
        %604 = vrot.lane.b32.xlu0 %v524, 127
        %v605 = vpop.permute.xlu0 %604
        %606 = vrot.lane.b32.xlu0 %v525, 127
        %v607 = vpop.permute.xlu0 %606
        %608 = vrot.lane.b32.xlu0 %v551, 127
        %v609 = vpop.permute.xlu0 %608
        %610 = vrot.lane.b32.xlu0 %v526, 127
        %v611 = vpop.permute.xlu0 %610
        %612 = vrot.lane.b32.xlu0 %v527, 127
        %v613 = vpop.permute.xlu0 %612
        %614 = vrot.lane.b32.xlu0 %v552, 127
        %v615 = vpop.permute.xlu0 %614
        %616 = vrot.lane.b32.xlu0 %v528, 127
        %v617 = vpop.permute.xlu0 %616
        %618 = vrot.lane.b32.xlu0 %v529, 127
        %v619 = vpop.permute.xlu0 %618
        %620 = vrot.lane.b32.xlu0 %v553, 127
        %v621 = vpop.permute.xlu0 %620
        %vm622 = vcmask 1039360
        %v623 = vsel %vm622, %v599, %v601
        %v624 = vsel %vm622, %v601, %v603
        %v625 = vsel %vm622, %v605, %v607
        %v626 = vsel %vm622, %v607, %v609
        %v627 = vsel %vm622, %v611, %v613
        %v628 = vsel %vm622, %v613, %v615
        %v629 = vsel %vm622, %v617, %v619
        %v630 = vsel %vm622, %v619, %v621
        %651 = vrot.lane.b32.xlu0 %v574, 126
        %v652 = vpop.permute.xlu0 %651
        %653 = vrot.lane.b32.xlu0 %v575, 126
        %v654 = vpop.permute.xlu0 %653
        %655 = vrot.lane.b32.xlu0 %v576, 126
        %v656 = vpop.permute.xlu0 %655
        %657 = vrot.lane.b32.xlu0 %v577, 126
        %v658 = vpop.permute.xlu0 %657
        %659 = vrot.lane.b32.xlu0 %v578, 126
        %v660 = vpop.permute.xlu0 %659
        %661 = vrot.lane.b32.xlu0 %v579, 126
        %v662 = vpop.permute.xlu0 %661
        %663 = vrot.lane.b32.xlu0 %v580, 126
        %v664 = vpop.permute.xlu0 %663
        %665 = vrot.lane.b32.xlu0 %v581, 126
        %v666 = vpop.permute.xlu0 %665
        %667 = vrot.lane.b32.xlu0 %v582, 126
        %v668 = vpop.permute.xlu0 %667
        %669 = vrot.lane.b32.xlu0 %v583, 126
        %v670 = vpop.permute.xlu0 %669
        %671 = vrot.lane.b32.xlu0 %v584, 126
        %v672 = vpop.permute.xlu0 %671
        %673 = vrot.lane.b32.xlu0 %v585, 126
        %v674 = vpop.permute.xlu0 %673
        %vm675 = vcmask 1031168
        %v676 = vsel %vm675, %v652, %v654
        %v677 = vsel %vm675, %v654, %v656
        %v678 = vsel %vm675, %v658, %v660
        %v679 = vsel %vm675, %v660, %v662
        %v680 = vsel %vm675, %v664, %v666
        %v681 = vsel %vm675, %v666, %v668
        %v682 = vsel %vm675, %v670, %v672
        %v683 = vsel %vm675, %v672, %v674
        %v692 = vld [vmem:[%s5] sm:$0xff]
        %vm693 = vcmask 785408
        %v695 = vsel %vm693, %v692, 0
        %697 = vmatprep.subr.mxu0 %v543
        %698 = vmatpush1.msra.mxu0 %v542
        %699 = vmatprep.subr.mxu0 %v545
        %700 = vmatpush1.msra.mxu0 %v544
        %701 = vmatprep.subr.mxu0 %v547
        %702 = vmatpush1.msra.mxu0 %v546
        %703 = vmatprep.subr.mxu0 %v549
        %704 = vmatpush1.msra.mxu0 %v548
        %705 = vmatprep.subr.mxu0 %v624
        %706 = vmatpush1.msra.mxu0 %v623
        %707 = vmatprep.subr.mxu0 %v626
        %708 = vmatpush1.msra.mxu0 %v625
        %709 = vmatprep.subr.mxu0 %v628
        %710 = vmatpush1.msra.mxu0 %v627
        %711 = vmatprep.subr.mxu0 %v630
        %712 = vmatpush1.msra.mxu0 %v629
        %713 = vmatprep.subr.mxu0 %v677
        %714 = vmatpush1.msra.mxu0 %v676
        %715 = vmatprep.subr.mxu0 %v679
        %716 = vmatpush1.msra.mxu0 %v678
        %717 = vmatprep.subr.mxu0 %v681
        %718 = vmatpush1.msra.mxu0 %v680
        %719 = vmatprep.subr.mxu0 %v683
        %720 = vmatpush1.msra.mxu0 %v682
        %721 = vmatprep.subr.mxu0 0.0
        %722 = vmatpush1.msra.mxu0 0.0
        %723 = vmatprep.subr.mxu0 0.0
        %724 = vmatpush1.msra.mxu0 0.0
        %725 = vmatprep.subr.mxu0 0.0
        %726 = vmatpush1.msra.mxu0 0.0
        %727 = vmatprep.subr.mxu0 0.0
        %728 = vmatpush1.msra.mxu0 0.0
        %729 = vmatprep.subr.mxu0 0.0
        %730 = vmatpush1.msra.mxu0 0.0
        %731 = vmatprep.subr.mxu0 0.0
        %732 = vmatpush1.msra.mxu0 0.0
        %733 = vmatprep.subr.mxu0 0.0
        %734 = vmatpush1.msra.mxu0 0.0
        %735 = vmatprep.subr.mxu0 0.0
        %736 = vmatpush1.msra.mxu0 0.0
        %737 = vmatprep.subr.mxu0 0.0
        %738 = vmatpush1.msra.mxu0 0.0
        %739 = vmatprep.subr.mxu0 0.0
        %740 = vmatpush1.msra.mxu0 0.0
        %741 = vmatprep.subr.mxu0 0.0
        %742 = vmatpush1.msra.mxu0 0.0
        %743 = vmatprep.subr.mxu0 0.0
        %744 = vmatpush1.msra.mxu0 0.0
        %745 = vmatprep.subr.mxu0 0.0
        %746 = vmatpush1.msra.mxu0 0.0
        %747 = vmatprep.subr.mxu0 0.0
        %748 = vmatpush1.msra.mxu0 0.0
        %749 = vmatprep.subr.mxu0 0.0
        %750 = vmatpush1.msra.mxu0 0.0
        %751 = vmatprep.subr.mxu0 0.0
        %752 = vmatpush1.msra.mxu0 0.0
        %753 = vmatprep.subr.mxu0 0.0
        %754 = vmatpush1.msra.mxu0 0.0
        %755 = vmatprep.subr.mxu0 0.0
        %756 = vmatpush1.msra.mxu0 0.0
        %757 = vmatprep.subr.mxu0 0.0
        %758 = vmatpush1.msra.mxu0 0.0
        %759 = vmatprep.subr.mxu0 0.0
        %760 = vmatpush1.msra.mxu0 0.0
        %761 = vmatprep.mubr.f32.mxu0 0.0
        %762 = vmatmul.mubr.f32.gmra.mrb[0].mxu0 %v695
        %v763 = vpop.f32.mrb[0].mxu0
        %v764 = vadd.f32 0.0, %v763
        %v765 = vpop.f32.mrb[0].mxu0
        %v766 = vadd.f32 0.0, %v765
        %767 = vdwg.mxu0
        %768 = vst [vmem:[%s271] sm:$0xff] %v764
        %769 = vst [vmem:[%s271 + $0x8] sm:$0xff] %v766
        %v770 = vld [vmem:[#allocation2] sm:$0xff]
        %v771 = vld [vmem:[#allocation2 + $0x8] sm:$0xff]
        %v772 = vld [vmem:[#allocation2 + $0x10] sm:$0xff]
        %v773 = vld [vmem:[#allocation2 + $0x18] sm:$0xff]
        %v774 = vld [vmem:[#allocation2 + $0x20] sm:$0xff]
        %v775 = vld [vmem:[#allocation2 + $0x28] sm:$0xff]
        %v776 = vld [vmem:[#allocation2 + $0x30] sm:$0xff]
        %v777 = vld [vmem:[#allocation2 + $0x38] sm:$0xff]
        %v778 = vld [vmem:[#allocation2 + $0x40] sm:$0xff]
        %v779 = vld [vmem:[#allocation2 + $0x48] sm:$0xff]
        %v780 = vld [vmem:[#allocation2 + $0x50] sm:$0xff]
        %v781 = vld [vmem:[#allocation2 + $0x58] sm:$0xff]
        %v782 = vld [vmem:[%s6] sm:$0x3]
        %v784 = vlaneseq
        %v785 = vshrl.u32 %v784, 7
        %v786 = vsub.s32 0, %v785
        %v787 = vrot.slane %v782, %v786
        %v788 = vlaneseq
        %v789 = vshrl.u32 %v788, 7
        %v790 = vsub.s32 1, %v789
        %v791 = vrot.slane %v782, %v790
        %792 = vrot.lane.b32.xlu0 %v787, 16
        %v793 = vpop.permute.xlu0 %792
        %794 = vrot.lane.b32.xlu0 %v791, 16
        %v795 = vpop.permute.xlu0 %794
        %v796 = vsel %vm345, %v793, %v795
        %v800 = vmul.f32 %v770, %v793
        %v801 = vmul.f32 %v771, %v796
        %v802 = vmul.f32 %v772, %v795
        %v803 = vmul.f32 %v773, %v793
        %v804 = vmul.f32 %v774, %v796
        %v805 = vmul.f32 %v775, %v795
        %v806 = vmul.f32 %v776, %v793
        %v807 = vmul.f32 %v777, %v796
        %v808 = vmul.f32 %v778, %v795
        %v809 = vmul.f32 %v779, %v793
        %v810 = vmul.f32 %v780, %v796
        %v811 = vmul.f32 %v781, %v795
        %v812 = vld [vmem:[%s554] sm:$0x3]
        %v814 = vlaneseq
        %v815 = vshrl.u32 %v814, 7
        %v816 = vsub.s32 0, %v815
        %v817 = vrot.slane %v812, %v816
        %v818 = vlaneseq
        %v819 = vshrl.u32 %v818, 7
        %v820 = vsub.s32 1, %v819
        %v821 = vrot.slane %v812, %v820
        %822 = vrot.lane.b32.xlu0 %v817, 18
        %v823 = vpop.permute.xlu0 %822
        %824 = vrot.lane.b32.xlu0 %v821, 18
        %v825 = vpop.permute.xlu0 %824
        %vm826 = vcmask 146432
        %v827 = vsel %vm826, %v823, %v825
        %v831 = vmul.f32 %v770, %v823
        %v832 = vmul.f32 %v771, %v827
        %v833 = vmul.f32 %v772, %v825
        %v834 = vmul.f32 %v773, %v823
        %v835 = vmul.f32 %v774, %v827
        %v836 = vmul.f32 %v775, %v825
        %v837 = vmul.f32 %v776, %v823
        %v838 = vmul.f32 %v777, %v827
        %v839 = vmul.f32 %v778, %v825
        %v840 = vmul.f32 %v779, %v823
        %v841 = vmul.f32 %v780, %v827
        %v842 = vmul.f32 %v781, %v825
        %855 = vrot.lane.b32.xlu0 %v770, 127
        %v856 = vpop.permute.xlu0 %855
        %857 = vrot.lane.b32.xlu0 %v771, 127
        %v858 = vpop.permute.xlu0 %857
        %859 = vrot.lane.b32.xlu0 %v772, 127
        %v860 = vpop.permute.xlu0 %859
        %861 = vrot.lane.b32.xlu0 %v773, 127
        %v862 = vpop.permute.xlu0 %861
        %863 = vrot.lane.b32.xlu0 %v774, 127
        %v864 = vpop.permute.xlu0 %863
        %865 = vrot.lane.b32.xlu0 %v775, 127
        %v866 = vpop.permute.xlu0 %865
        %867 = vrot.lane.b32.xlu0 %v776, 127
        %v868 = vpop.permute.xlu0 %867
        %869 = vrot.lane.b32.xlu0 %v777, 127
        %v870 = vpop.permute.xlu0 %869
        %871 = vrot.lane.b32.xlu0 %v778, 127
        %v872 = vpop.permute.xlu0 %871
        %873 = vrot.lane.b32.xlu0 %v779, 127
        %v874 = vpop.permute.xlu0 %873
        %875 = vrot.lane.b32.xlu0 %v780, 127
        %v876 = vpop.permute.xlu0 %875
        %877 = vrot.lane.b32.xlu0 %v781, 127
        %v878 = vpop.permute.xlu0 %877
        %v879 = vsel %vm622, %v856, %v858
        %v880 = vsel %vm622, %v858, %v860
        %v881 = vsel %vm622, %v862, %v864
        %v882 = vsel %vm622, %v864, %v866
        %v883 = vsel %vm622, %v868, %v870
        %v884 = vsel %vm622, %v870, %v872
        %v885 = vsel %vm622, %v874, %v876
        %v886 = vsel %vm622, %v876, %v878
        %899 = vrot.lane.b32.xlu0 %v831, 126
        %v900 = vpop.permute.xlu0 %899
        %901 = vrot.lane.b32.xlu0 %v832, 126
        %v902 = vpop.permute.xlu0 %901
        %903 = vrot.lane.b32.xlu0 %v833, 126
        %v904 = vpop.permute.xlu0 %903
        %905 = vrot.lane.b32.xlu0 %v834, 126
        %v906 = vpop.permute.xlu0 %905
        %907 = vrot.lane.b32.xlu0 %v835, 126
        %v908 = vpop.permute.xlu0 %907
        %909 = vrot.lane.b32.xlu0 %v836, 126
        %v910 = vpop.permute.xlu0 %909
        %911 = vrot.lane.b32.xlu0 %v837, 126
        %v912 = vpop.permute.xlu0 %911
        %913 = vrot.lane.b32.xlu0 %v838, 126
        %v914 = vpop.permute.xlu0 %913
        %915 = vrot.lane.b32.xlu0 %v839, 126
        %v916 = vpop.permute.xlu0 %915
        %917 = vrot.lane.b32.xlu0 %v840, 126
        %v918 = vpop.permute.xlu0 %917
        %919 = vrot.lane.b32.xlu0 %v841, 126
        %v920 = vpop.permute.xlu0 %919
        %921 = vrot.lane.b32.xlu0 %v842, 126
        %v922 = vpop.permute.xlu0 %921
        %v923 = vsel %vm675, %v900, %v902
        %v924 = vsel %vm675, %v902, %v904
        %v925 = vsel %vm675, %v906, %v908
        %v926 = vsel %vm675, %v908, %v910
        %v927 = vsel %vm675, %v912, %v914
        %v928 = vsel %vm675, %v914, %v916
        %v929 = vsel %vm675, %v918, %v920
        %v930 = vsel %vm675, %v920, %v922
        %s931 = scalar_lea.vmem %s5, 8
        %v932 = vld [vmem:[%s931] sm:$0xff]
        %945 = vrot.lane.b32.xlu0 %v800, 112
        %v946 = vpop.permute.xlu0 %945
        %947 = vrot.lane.b32.xlu0 %v801, 112
        %v948 = vpop.permute.xlu0 %947
        %949 = vrot.lane.b32.xlu0 %v802, 112
        %v950 = vpop.permute.xlu0 %949
        %951 = vrot.lane.b32.xlu0 %v803, 112
        %v952 = vpop.permute.xlu0 %951
        %953 = vrot.lane.b32.xlu0 %v804, 112
        %v954 = vpop.permute.xlu0 %953
        %955 = vrot.lane.b32.xlu0 %v805, 112
        %v956 = vpop.permute.xlu0 %955
        %957 = vrot.lane.b32.xlu0 %v806, 112
        %v958 = vpop.permute.xlu0 %957
        %959 = vrot.lane.b32.xlu0 %v807, 112
        %v960 = vpop.permute.xlu0 %959
        %961 = vrot.lane.b32.xlu0 %v808, 112
        %v962 = vpop.permute.xlu0 %961
        %963 = vrot.lane.b32.xlu0 %v809, 112
        %v964 = vpop.permute.xlu0 %963
        %965 = vrot.lane.b32.xlu0 %v810, 112
        %v966 = vpop.permute.xlu0 %965
        %967 = vrot.lane.b32.xlu0 %v811, 112
        %v968 = vpop.permute.xlu0 %967
        %969 = vrot.lane.b32.xlu0 %v879, 112
        %v970 = vpop.permute.xlu0 %969
        %971 = vrot.lane.b32.xlu0 %v880, 112
        %v972 = vpop.permute.xlu0 %971
        %973 = vrot.lane.b32.xlu0 %v860, 112
        %v974 = vpop.permute.xlu0 %973
        %975 = vrot.lane.b32.xlu0 %v881, 112
        %v976 = vpop.permute.xlu0 %975
        %977 = vrot.lane.b32.xlu0 %v882, 112
        %v978 = vpop.permute.xlu0 %977
        %979 = vrot.lane.b32.xlu0 %v866, 112
        %v980 = vpop.permute.xlu0 %979
        %981 = vrot.lane.b32.xlu0 %v883, 112
        %v982 = vpop.permute.xlu0 %981
        %983 = vrot.lane.b32.xlu0 %v884, 112
        %v984 = vpop.permute.xlu0 %983
        %985 = vrot.lane.b32.xlu0 %v872, 112
        %v986 = vpop.permute.xlu0 %985
        %987 = vrot.lane.b32.xlu0 %v885, 112
        %v988 = vpop.permute.xlu0 %987
        %989 = vrot.lane.b32.xlu0 %v886, 112
        %v990 = vpop.permute.xlu0 %989
        %991 = vrot.lane.b32.xlu0 %v878, 112
        %v992 = vpop.permute.xlu0 %991
        %993 = vrot.lane.b32.xlu0 %v923, 112
        %v994 = vpop.permute.xlu0 %993
        %995 = vrot.lane.b32.xlu0 %v924, 112
        %v996 = vpop.permute.xlu0 %995
        %997 = vrot.lane.b32.xlu0 %v904, 112
        %v998 = vpop.permute.xlu0 %997
        %999 = vrot.lane.b32.xlu0 %v925, 112
        %v1000 = vpop.permute.xlu0 %999
        %1001 = vrot.lane.b32.xlu0 %v926, 112
        %v1002 = vpop.permute.xlu0 %1001
        %1003 = vrot.lane.b32.xlu0 %v910, 112
        %v1004 = vpop.permute.xlu0 %1003
        %1005 = vrot.lane.b32.xlu0 %v927, 112
        %v1006 = vpop.permute.xlu0 %1005
        %1007 = vrot.lane.b32.xlu0 %v928, 112
        %v1008 = vpop.permute.xlu0 %1007
        %1009 = vrot.lane.b32.xlu0 %v916, 112
        %v1010 = vpop.permute.xlu0 %1009
        %1011 = vrot.lane.b32.xlu0 %v929, 112
        %v1012 = vpop.permute.xlu0 %1011
        %1013 = vrot.lane.b32.xlu0 %v930, 112
        %v1014 = vpop.permute.xlu0 %1013
        %1015 = vrot.lane.b32.xlu0 %v922, 112
        %v1016 = vpop.permute.xlu0 %1015
        %vm1017 = vcmask 916480
        %v1018 = vsel %vm1017, %v946, %v948
        %v1019 = vsel %vm1017, %v948, %v950
        %v1020 = vsel %vm1017, %v952, %v954
        %v1021 = vsel %vm1017, %v954, %v956
        %v1022 = vsel %vm1017, %v958, %v960
        %v1023 = vsel %vm1017, %v960, %v962
        %v1024 = vsel %vm1017, %v964, %v966
        %v1025 = vsel %vm1017, %v966, %v968
        %v1026 = vsel %vm1017, %v970, %v972
        %v1027 = vsel %vm1017, %v972, %v974
        %v1028 = vsel %vm1017, %v976, %v978
        %v1029 = vsel %vm1017, %v978, %v980
        %v1030 = vsel %vm1017, %v982, %v984
        %v1031 = vsel %vm1017, %v984, %v986
        %v1032 = vsel %vm1017, %v988, %v990
        %v1033 = vsel %vm1017, %v990, %v992
        %v1034 = vsel %vm1017, %v994, %v996
        %v1035 = vsel %vm1017, %v996, %v998
        %v1036 = vsel %vm1017, %v1000, %v1002
        %v1037 = vsel %vm1017, %v1002, %v1004
        %v1038 = vsel %vm1017, %v1006, %v1008
        %v1039 = vsel %vm1017, %v1008, %v1010
        %v1040 = vsel %vm1017, %v1012, %v1014
        %v1041 = vsel %vm1017, %v1014, %v1016
        %v1067 = vsel %vm693, %v932, 0
        %1069 = vmatprep.subr.mxu0 %v1019
        %1070 = vmatpush1.msra.mxu0 %v1018
        %1071 = vmatprep.subr.mxu0 %v1021
        %1072 = vmatpush1.msra.mxu0 %v1020
        %1073 = vmatprep.subr.mxu0 %v1023
        %1074 = vmatpush1.msra.mxu0 %v1022
        %1075 = vmatprep.subr.mxu0 %v1025
        %1076 = vmatpush1.msra.mxu0 %v1024
        %1077 = vmatprep.subr.mxu0 %v1027
        %1078 = vmatpush1.msra.mxu0 %v1026
        %1079 = vmatprep.subr.mxu0 %v1029
        %1080 = vmatpush1.msra.mxu0 %v1028
        %1081 = vmatprep.subr.mxu0 %v1031
        %1082 = vmatpush1.msra.mxu0 %v1030
        %1083 = vmatprep.subr.mxu0 %v1033
        %1084 = vmatpush1.msra.mxu0 %v1032
        %1085 = vmatprep.subr.mxu0 %v1035
        %1086 = vmatpush1.msra.mxu0 %v1034
        %1087 = vmatprep.subr.mxu0 %v1037
        %1088 = vmatpush1.msra.mxu0 %v1036
        %1089 = vmatprep.subr.mxu0 %v1039
        %1090 = vmatpush1.msra.mxu0 %v1038
        %1091 = vmatprep.subr.mxu0 %v1041
        %1092 = vmatpush1.msra.mxu0 %v1040
        %1093 = vmatprep.subr.mxu0 0.0
        %1094 = vmatpush1.msra.mxu0 0.0
        %1095 = vmatprep.subr.mxu0 0.0
        %1096 = vmatpush1.msra.mxu0 0.0
        %1097 = vmatprep.subr.mxu0 0.0
        %1098 = vmatpush1.msra.mxu0 0.0
        %1099 = vmatprep.subr.mxu0 0.0
        %1100 = vmatpush1.msra.mxu0 0.0
        %1101 = vmatprep.subr.mxu0 0.0
        %1102 = vmatpush1.msra.mxu0 0.0
        %1103 = vmatprep.subr.mxu0 0.0
        %1104 = vmatpush1.msra.mxu0 0.0
        %1105 = vmatprep.subr.mxu0 0.0
        %1106 = vmatpush1.msra.mxu0 0.0
        %1107 = vmatprep.subr.mxu0 0.0
        %1108 = vmatpush1.msra.mxu0 0.0
        %1109 = vmatprep.subr.mxu0 0.0
        %1110 = vmatpush1.msra.mxu0 0.0
        %1111 = vmatprep.subr.mxu0 0.0
        %1112 = vmatpush1.msra.mxu0 0.0
        %1113 = vmatprep.subr.mxu0 0.0
        %1114 = vmatpush1.msra.mxu0 0.0
        %1115 = vmatprep.subr.mxu0 0.0
        %1116 = vmatpush1.msra.mxu0 0.0
        %1117 = vmatprep.subr.mxu0 0.0
        %1118 = vmatpush1.msra.mxu0 0.0
        %1119 = vmatprep.subr.mxu0 0.0
        %1120 = vmatpush1.msra.mxu0 0.0
        %1121 = vmatprep.subr.mxu0 0.0
        %1122 = vmatpush1.msra.mxu0 0.0
        %1123 = vmatprep.subr.mxu0 0.0
        %1124 = vmatpush1.msra.mxu0 0.0
        %1125 = vmatprep.subr.mxu0 0.0
        %1126 = vmatpush1.msra.mxu0 0.0
        %1127 = vmatprep.subr.mxu0 0.0
        %1128 = vmatpush1.msra.mxu0 0.0
        %1129 = vmatprep.subr.mxu0 0.0
        %1130 = vmatpush1.msra.mxu0 0.0
        %1131 = vmatprep.subr.mxu0 0.0
        %1132 = vmatpush1.msra.mxu0 0.0
        %1133 = vmatprep.mubr.f32.mxu0 0.0
        %1134 = vmatmul.mubr.f32.gmra.mrb[0].mxu0 %v1067
        %v1135 = vpop.f32.mrb[0].mxu0
        %v1136 = vadd.f32 0.0, %v1135
        %v1137 = vpop.f32.mrb[0].mxu0
        %v1138 = vadd.f32 0.0, %v1137
        %1139 = vdwg.mxu0
        %v1140 = vld [vmem:[%s271] sm:$0xff]
        %v1141 = vld [vmem:[%s271 + $0x8] sm:$0xff]
        %v1142 = vadd.f32 %v1140, %v1136
        %v1143 = vadd.f32 %v1141, %v1138
        %1144 = vst [vmem:[%s271] sm:$0xff] %v1142
        %1145 = vst [vmem:[%s271 + $0x8] sm:$0xff] %v1143
        %v1146 = vld [vmem:[#allocation2] sm:$0xff]
        %v1147 = vld [vmem:[#allocation2 + $0x8] sm:$0xff]
        %v1148 = vld [vmem:[#allocation2 + $0x10] sm:$0xff]
        %v1149 = vld [vmem:[#allocation2 + $0x18] sm:$0xff]
        %v1150 = vld [vmem:[#allocation2 + $0x20] sm:$0xff]
        %v1151 = vld [vmem:[#allocation2 + $0x28] sm:$0xff]
        %v1152 = vld [vmem:[#allocation2 + $0x30] sm:$0xff]
        %v1153 = vld [vmem:[#allocation2 + $0x38] sm:$0xff]
        %v1154 = vld [vmem:[#allocation2 + $0x40] sm:$0xff]
        %v1155 = vld [vmem:[#allocation2 + $0x48] sm:$0xff]
        %v1156 = vld [vmem:[#allocation2 + $0x50] sm:$0xff]
        %v1157 = vld [vmem:[#allocation2 + $0x58] sm:$0xff]
        %v1158 = vld [vmem:[%s6] sm:$0x3]
        %v1160 = vlaneseq
        %v1161 = vshrl.u32 %v1160, 7
        %v1162 = vsub.s32 0, %v1161
        %v1163 = vrot.slane %v1158, %v1162
        %v1164 = vlaneseq
        %v1165 = vshrl.u32 %v1164, 7
        %v1166 = vsub.s32 1, %v1165
        %v1167 = vrot.slane %v1158, %v1166
        %1168 = vrot.lane.b32.xlu0 %v1163, 32
        %v1169 = vpop.permute.xlu0 %1168
        %1170 = vrot.lane.b32.xlu0 %v1167, 32
        %v1171 = vpop.permute.xlu0 %1170
        %vm1172 = vcmask 261120
        %v1173 = vsel %vm1172, %v1169, %v1171
        %v1177 = vmul.f32 %v1146, %v1169
        %v1178 = vmul.f32 %v1147, %v1173
        %v1179 = vmul.f32 %v1148, %v1171
        %v1180 = vmul.f32 %v1149, %v1169
        %v1181 = vmul.f32 %v1150, %v1173
        %v1182 = vmul.f32 %v1151, %v1171
        %v1183 = vmul.f32 %v1152, %v1169
        %v1184 = vmul.f32 %v1153, %v1173
        %v1185 = vmul.f32 %v1154, %v1171
        %v1186 = vmul.f32 %v1155, %v1169
        %v1187 = vmul.f32 %v1156, %v1173
        %v1188 = vmul.f32 %v1157, %v1171
        %v1189 = vld [vmem:[%s554] sm:$0x3]
        %v1191 = vlaneseq
        %v1192 = vshrl.u32 %v1191, 7
        %v1193 = vsub.s32 0, %v1192
        %v1194 = vrot.slane %v1189, %v1193
        %v1195 = vlaneseq
        %v1196 = vshrl.u32 %v1195, 7
        %v1197 = vsub.s32 1, %v1196
        %v1198 = vrot.slane %v1189, %v1197
        %1199 = vrot.lane.b32.xlu0 %v1194, 34
        %v1200 = vpop.permute.xlu0 %1199
        %1201 = vrot.lane.b32.xlu0 %v1198, 34
        %v1202 = vpop.permute.xlu0 %1201
        %v1203 = vsel %vm457, %v1200, %v1202
        %v1207 = vmul.f32 %v1146, %v1200
        %v1208 = vmul.f32 %v1147, %v1203
        %v1209 = vmul.f32 %v1148, %v1202
        %v1210 = vmul.f32 %v1149, %v1200
        %v1211 = vmul.f32 %v1150, %v1203
        %v1212 = vmul.f32 %v1151, %v1202
        %v1213 = vmul.f32 %v1152, %v1200
        %v1214 = vmul.f32 %v1153, %v1203
        %v1215 = vmul.f32 %v1154, %v1202
        %v1216 = vmul.f32 %v1155, %v1200
        %v1217 = vmul.f32 %v1156, %v1203
        %v1218 = vmul.f32 %v1157, %v1202
        %1231 = vrot.lane.b32.xlu0 %v1146, 127
        %v1232 = vpop.permute.xlu0 %1231
        %1233 = vrot.lane.b32.xlu0 %v1147, 127
        %v1234 = vpop.permute.xlu0 %1233
        %1235 = vrot.lane.b32.xlu0 %v1148, 127
        %v1236 = vpop.permute.xlu0 %1235
        %1237 = vrot.lane.b32.xlu0 %v1149, 127
        %v1238 = vpop.permute.xlu0 %1237
        %1239 = vrot.lane.b32.xlu0 %v1150, 127
        %v1240 = vpop.permute.xlu0 %1239
        %1241 = vrot.lane.b32.xlu0 %v1151, 127
        %v1242 = vpop.permute.xlu0 %1241
        %1243 = vrot.lane.b32.xlu0 %v1152, 127
        %v1244 = vpop.permute.xlu0 %1243
        %1245 = vrot.lane.b32.xlu0 %v1153, 127
        %v1246 = vpop.permute.xlu0 %1245
        %1247 = vrot.lane.b32.xlu0 %v1154, 127
        %v1248 = vpop.permute.xlu0 %1247
        %1249 = vrot.lane.b32.xlu0 %v1155, 127
        %v1250 = vpop.permute.xlu0 %1249
        %1251 = vrot.lane.b32.xlu0 %v1156, 127
        %v1252 = vpop.permute.xlu0 %1251
        %1253 = vrot.lane.b32.xlu0 %v1157, 127
        %v1254 = vpop.permute.xlu0 %1253
        %v1255 = vsel %vm622, %v1232, %v1234
        %v1256 = vsel %vm622, %v1234, %v1236
        %v1257 = vsel %vm622, %v1238, %v1240
        %v1258 = vsel %vm622, %v1240, %v1242
        %v1259 = vsel %vm622, %v1244, %v1246
        %v1260 = vsel %vm622, %v1246, %v1248
        %v1261 = vsel %vm622, %v1250, %v1252
        %v1262 = vsel %vm622, %v1252, %v1254
        %1275 = vrot.lane.b32.xlu0 %v1207, 126
        %v1276 = vpop.permute.xlu0 %1275
        %1277 = vrot.lane.b32.xlu0 %v1208, 126
        %v1278 = vpop.permute.xlu0 %1277
        %1279 = vrot.lane.b32.xlu0 %v1209, 126
        %v1280 = vpop.permute.xlu0 %1279
        %1281 = vrot.lane.b32.xlu0 %v1210, 126
        %v1282 = vpop.permute.xlu0 %1281
        %1283 = vrot.lane.b32.xlu0 %v1211, 126
        %v1284 = vpop.permute.xlu0 %1283
        %1285 = vrot.lane.b32.xlu0 %v1212, 126
        %v1286 = vpop.permute.xlu0 %1285
        %1287 = vrot.lane.b32.xlu0 %v1213, 126
        %v1288 = vpop.permute.xlu0 %1287
        %1289 = vrot.lane.b32.xlu0 %v1214, 126
        %v1290 = vpop.permute.xlu0 %1289
        %1291 = vrot.lane.b32.xlu0 %v1215, 126
        %v1292 = vpop.permute.xlu0 %1291
        %1293 = vrot.lane.b32.xlu0 %v1216, 126
        %v1294 = vpop.permute.xlu0 %1293
        %1295 = vrot.lane.b32.xlu0 %v1217, 126
        %v1296 = vpop.permute.xlu0 %1295
        %1297 = vrot.lane.b32.xlu0 %v1218, 126
        %v1298 = vpop.permute.xlu0 %1297
        %v1299 = vsel %vm675, %v1276, %v1278
        %v1300 = vsel %vm675, %v1278, %v1280
        %v1301 = vsel %vm675, %v1282, %v1284
        %v1302 = vsel %vm675, %v1284, %v1286
        %v1303 = vsel %vm675, %v1288, %v1290
        %v1304 = vsel %vm675, %v1290, %v1292
        %v1305 = vsel %vm675, %v1294, %v1296
        %v1306 = vsel %vm675, %v1296, %v1298
        %s1307 = scalar_lea.vmem %s5, 16
        %v1308 = vld [vmem:[%s1307] sm:$0xff]
        %1321 = vrot.lane.b32.xlu0 %v1177, 96
        %v1322 = vpop.permute.xlu0 %1321
        %1323 = vrot.lane.b32.xlu0 %v1178, 96
        %v1324 = vpop.permute.xlu0 %1323
        %1325 = vrot.lane.b32.xlu0 %v1179, 96
        %v1326 = vpop.permute.xlu0 %1325
        %1327 = vrot.lane.b32.xlu0 %v1180, 96
        %v1328 = vpop.permute.xlu0 %1327
        %1329 = vrot.lane.b32.xlu0 %v1181, 96
        %v1330 = vpop.permute.xlu0 %1329
        %1331 = vrot.lane.b32.xlu0 %v1182, 96
        %v1332 = vpop.permute.xlu0 %1331
        %1333 = vrot.lane.b32.xlu0 %v1183, 96
        %v1334 = vpop.permute.xlu0 %1333
        %1335 = vrot.lane.b32.xlu0 %v1184, 96
        %v1336 = vpop.permute.xlu0 %1335
        %1337 = vrot.lane.b32.xlu0 %v1185, 96
        %v1338 = vpop.permute.xlu0 %1337
        %1339 = vrot.lane.b32.xlu0 %v1186, 96
        %v1340 = vpop.permute.xlu0 %1339
        %1341 = vrot.lane.b32.xlu0 %v1187, 96
        %v1342 = vpop.permute.xlu0 %1341
        %1343 = vrot.lane.b32.xlu0 %v1188, 96
        %v1344 = vpop.permute.xlu0 %1343
        %1345 = vrot.lane.b32.xlu0 %v1255, 96
        %v1346 = vpop.permute.xlu0 %1345
        %1347 = vrot.lane.b32.xlu0 %v1256, 96
        %v1348 = vpop.permute.xlu0 %1347
        %1349 = vrot.lane.b32.xlu0 %v1236, 96
        %v1350 = vpop.permute.xlu0 %1349
        %1351 = vrot.lane.b32.xlu0 %v1257, 96
        %v1352 = vpop.permute.xlu0 %1351
        %1353 = vrot.lane.b32.xlu0 %v1258, 96
        %v1354 = vpop.permute.xlu0 %1353
        %1355 = vrot.lane.b32.xlu0 %v1242, 96
        %v1356 = vpop.permute.xlu0 %1355
        %1357 = vrot.lane.b32.xlu0 %v1259, 96
        %v1358 = vpop.permute.xlu0 %1357
        %1359 = vrot.lane.b32.xlu0 %v1260, 96
        %v1360 = vpop.permute.xlu0 %1359
        %1361 = vrot.lane.b32.xlu0 %v1248, 96
        %v1362 = vpop.permute.xlu0 %1361
        %1363 = vrot.lane.b32.xlu0 %v1261, 96
        %v1364 = vpop.permute.xlu0 %1363
        %1365 = vrot.lane.b32.xlu0 %v1262, 96
        %v1366 = vpop.permute.xlu0 %1365
        %1367 = vrot.lane.b32.xlu0 %v1254, 96
        %v1368 = vpop.permute.xlu0 %1367
        %1369 = vrot.lane.b32.xlu0 %v1299, 96
        %v1370 = vpop.permute.xlu0 %1369
        %1371 = vrot.lane.b32.xlu0 %v1300, 96
        %v1372 = vpop.permute.xlu0 %1371
        %1373 = vrot.lane.b32.xlu0 %v1280, 96
        %v1374 = vpop.permute.xlu0 %1373
        %1375 = vrot.lane.b32.xlu0 %v1301, 96
        %v1376 = vpop.permute.xlu0 %1375
        %1377 = vrot.lane.b32.xlu0 %v1302, 96
        %v1378 = vpop.permute.xlu0 %1377
        %1379 = vrot.lane.b32.xlu0 %v1286, 96
        %v1380 = vpop.permute.xlu0 %1379
        %1381 = vrot.lane.b32.xlu0 %v1303, 96
        %v1382 = vpop.permute.xlu0 %1381
        %1383 = vrot.lane.b32.xlu0 %v1304, 96
        %v1384 = vpop.permute.xlu0 %1383
        %1385 = vrot.lane.b32.xlu0 %v1292, 96
        %v1386 = vpop.permute.xlu0 %1385
        %1387 = vrot.lane.b32.xlu0 %v1305, 96
        %v1388 = vpop.permute.xlu0 %1387
        %1389 = vrot.lane.b32.xlu0 %v1306, 96
        %v1390 = vpop.permute.xlu0 %1389
        %1391 = vrot.lane.b32.xlu0 %v1298, 96
        %v1392 = vpop.permute.xlu0 %1391
        %v1393 = vsel %vm693, %v1322, %v1324
        %v1394 = vsel %vm693, %v1324, %v1326
        %v1395 = vsel %vm693, %v1328, %v1330
        %v1396 = vsel %vm693, %v1330, %v1332
        %v1397 = vsel %vm693, %v1334, %v1336
        %v1398 = vsel %vm693, %v1336, %v1338
        %v1399 = vsel %vm693, %v1340, %v1342
        %v1400 = vsel %vm693, %v1342, %v1344
        %v1401 = vsel %vm693, %v1346, %v1348
        %v1402 = vsel %vm693, %v1348, %v1350
        %v1403 = vsel %vm693, %v1352, %v1354
        %v1404 = vsel %vm693, %v1354, %v1356
        %v1405 = vsel %vm693, %v1358, %v1360
        %v1406 = vsel %vm693, %v1360, %v1362
        %v1407 = vsel %vm693, %v1364, %v1366
        %v1408 = vsel %vm693, %v1366, %v1368
        %v1409 = vsel %vm693, %v1370, %v1372
        %v1410 = vsel %vm693, %v1372, %v1374
        %v1411 = vsel %vm693, %v1376, %v1378
        %v1412 = vsel %vm693, %v1378, %v1380
        %v1413 = vsel %vm693, %v1382, %v1384
        %v1414 = vsel %vm693, %v1384, %v1386
        %v1415 = vsel %vm693, %v1388, %v1390
        %v1416 = vsel %vm693, %v1390, %v1392
        %v1442 = vsel %vm693, %v1308, 0
        %1444 = vmatprep.subr.mxu0 %v1394
        %1445 = vmatpush1.msra.mxu0 %v1393
        %1446 = vmatprep.subr.mxu0 %v1396
        %1447 = vmatpush1.msra.mxu0 %v1395
        %1448 = vmatprep.subr.mxu0 %v1398
        %1449 = vmatpush1.msra.mxu0 %v1397
        %1450 = vmatprep.subr.mxu0 %v1400
        %1451 = vmatpush1.msra.mxu0 %v1399
        %1452 = vmatprep.subr.mxu0 %v1402
        %1453 = vmatpush1.msra.mxu0 %v1401
        %1454 = vmatprep.subr.mxu0 %v1404
        %1455 = vmatpush1.msra.mxu0 %v1403
        %1456 = vmatprep.subr.mxu0 %v1406
        %1457 = vmatpush1.msra.mxu0 %v1405
        %1458 = vmatprep.subr.mxu0 %v1408
        %1459 = vmatpush1.msra.mxu0 %v1407
        %1460 = vmatprep.subr.mxu0 %v1410
        %1461 = vmatpush1.msra.mxu0 %v1409
        %1462 = vmatprep.subr.mxu0 %v1412
        %1463 = vmatpush1.msra.mxu0 %v1411
        %1464 = vmatprep.subr.mxu0 %v1414
        %1465 = vmatpush1.msra.mxu0 %v1413
        %1466 = vmatprep.subr.mxu0 %v1416
        %1467 = vmatpush1.msra.mxu0 %v1415
        %1468 = vmatprep.subr.mxu0 0.0
        %1469 = vmatpush1.msra.mxu0 0.0
        %1470 = vmatprep.subr.mxu0 0.0
        %1471 = vmatpush1.msra.mxu0 0.0
        %1472 = vmatprep.subr.mxu0 0.0
        %1473 = vmatpush1.msra.mxu0 0.0
        %1474 = vmatprep.subr.mxu0 0.0
        %1475 = vmatpush1.msra.mxu0 0.0
        %1476 = vmatprep.subr.mxu0 0.0
        %1477 = vmatpush1.msra.mxu0 0.0
        %1478 = vmatprep.subr.mxu0 0.0
        %1479 = vmatpush1.msra.mxu0 0.0
        %1480 = vmatprep.subr.mxu0 0.0
        %1481 = vmatpush1.msra.mxu0 0.0
        %1482 = vmatprep.subr.mxu0 0.0
        %1483 = vmatpush1.msra.mxu0 0.0
        %1484 = vmatprep.subr.mxu0 0.0
        %1485 = vmatpush1.msra.mxu0 0.0
        %1486 = vmatprep.subr.mxu0 0.0
        %1487 = vmatpush1.msra.mxu0 0.0
        %1488 = vmatprep.subr.mxu0 0.0
        %1489 = vmatpush1.msra.mxu0 0.0
        %1490 = vmatprep.subr.mxu0 0.0
        %1491 = vmatpush1.msra.mxu0 0.0
        %1492 = vmatprep.subr.mxu0 0.0
        %1493 = vmatpush1.msra.mxu0 0.0
        %1494 = vmatprep.subr.mxu0 0.0
        %1495 = vmatpush1.msra.mxu0 0.0
        %1496 = vmatprep.subr.mxu0 0.0
        %1497 = vmatpush1.msra.mxu0 0.0
        %1498 = vmatprep.subr.mxu0 0.0
        %1499 = vmatpush1.msra.mxu0 0.0
        %1500 = vmatprep.subr.mxu0 0.0
        %1501 = vmatpush1.msra.mxu0 0.0
        %1502 = vmatprep.subr.mxu0 0.0
        %1503 = vmatpush1.msra.mxu0 0.0
        %1504 = vmatprep.subr.mxu0 0.0
        %1505 = vmatpush1.msra.mxu0 0.0
        %1506 = vmatprep.subr.mxu0 0.0
        %1507 = vmatpush1.msra.mxu0 0.0
        %1508 = vmatprep.mubr.f32.mxu0 0.0
        %1509 = vmatmul.mubr.f32.gmra.mrb[0].mxu0 %v1442
        %v1510 = vpop.f32.mrb[0].mxu0
        %v1511 = vadd.f32 0.0, %v1510
        %v1512 = vpop.f32.mrb[0].mxu0
        %v1513 = vadd.f32 0.0, %v1512
        %1514 = vdwg.mxu0
        %v1515 = vld [vmem:[%s271] sm:$0xff]
        %v1516 = vld [vmem:[%s271 + $0x8] sm:$0xff]
        %v1517 = vadd.f32 %v1515, %v1511
        %v1518 = vadd.f32 %v1516, %v1513
        %1519 = vst [vmem:[%s271] sm:$0xff] %v1517
        %1520 = vst [vmem:[%s271 + $0x8] sm:$0xff] %v1518
        %s1521 = sand.u32 %s181, 1
        %s1522 = scalar_lea.sflag [#allocation4], %s1521
        %s1523 = sand.u32 %s181, 1
        %s1524 = smul.addr %s1523, 16
        %s1525 = scalar_lea.vmem [#allocation3], %s1524
        // Predicated region
        $region49: #{tpu_custom_call.1} parent=47 // pred_check
          %p1526 = pneg %p191
        $region50: #{tpu_custom_call.1} parent=47 // pred_check_branch
          %1528 = sbr.rel (%p1526) target = $region52
        $region51: #{tpu_custom_call.1} parent=47 // pred_region
          %s1530 = ssub.s32 256, 256
          %1531 = vsyncadd %s1522, %s1530
          %s1532 = smul.addr %s21, 2
          %s1533 = smul.addr %s1532, 128
          %s1534 = scalar_lea.hbm %s7, %s1533
          %s1536 = sshll.u32 %s1525, 4
          %s1537 = int_to_ptr.vmem [resolvable:$true] %s1536
          %1539 = dma.vmem_to_hbm [thread:$0]  %s1537, 256, %s1534, %s1522
        $region52: #{tpu_custom_call.1} parent=47 // pred_fallthru
          _
      $region48: #{tpu_custom_call.1} parent=5 // pred_fallthru
        _
      %p1540 = scmp.le.s32.totalorder 2, %s16
      // Predicated region
      $region53: #{tpu_custom_call.1} parent=5 // pred_check
        %p1541 = pneg %p1540
      $region54: #{tpu_custom_call.1} parent=5 // pred_check_branch
        %1543 = sbr.rel (%p1541) target = $region56
      $region55: #{tpu_custom_call.1} parent=5 // pred_region
        %s1544 = ssub.s32 %s16, 2
        // Predicated region
        $region57: #{tpu_custom_call.1} parent=55 // pred_check
          %p1545 = pneg %p197
        $region58: #{tpu_custom_call.1} parent=55 // pred_check_branch
          %1547 = sbr.rel (%p1545) target = $region60
        $region59: #{tpu_custom_call.1} parent=55 // pred_region
          %s1548 = sand.u32 %s182, 1
          %s1549 = scalar_lea.sflag [#allocation4], %s1548
          %s1550 = sand.u32 %s182, 1
          %s1551 = smul.addr %s1550, 16
          %s1552 = scalar_lea.vmem [#allocation3], %s1551
          %1553 = dma.done %s1549, 256
        $region60: #{tpu_custom_call.1} parent=55 // pred_fallthru
          _
      $region56: #{tpu_custom_call.1} parent=5 // pred_fallthru
        _
    $region6: #{tpu_custom_call.1} parent=1 // loop_footer
      %s20 = sadd.s32 1, %s16
    $region7: #{tpu_custom_call.1} parent=1 // loop_footer_branch
      %15 = sbr.rel target = $region3
    $region8: #{tpu_custom_call.1} parent=1 // loop_exit
      _
    %1554 = vsyncpa [#allocation4], 1
    %s1555 = scalar_lea.sflag [#allocation4], 1
    %1556 = vsyncpa %s1555, 1

</llo_original>
